<compile_context>
chip_gen: v7x
topology: tpu7x:2x2x1
jax: 0.10.0
libtpu: 0.0.40
codegen_flags: <defaults>
</compile_context>

<pallas_src>
import functools

import jax
import jax.numpy as jnp
from jax import lax
from jax.experimental import pallas as pl
from jax.experimental.pallas import tpu as pltpu


# ----------------------------------------------------------------------------
# Fused kernel: projections + attention + fc + residual + LN for a block of
# `batch_block` batch elements (default: the whole batch in one grid step).
# ----------------------------------------------------------------------------
def _self_attention_kernel(q_ref, k_ref, v_ref, mask_ref,
                           wq_ref, wk_ref, wv_ref, wfc_ref,
                           bfc_ref, gamma_ref, beta_ref,
                           out_ref, *maybe_attn_ref,
                           n_head, head_dim, len_q, len_k, batch_block,
                           inv_temperature, exp_dtype, exact_attn_recip):
    attn_ref = maybe_attn_ref[0] if maybe_attn_ref else None
    f32 = jnp.float32
    bf16 = jnp.bfloat16
    H, D, Lq, Lk = n_head, head_dim, len_q, len_k

    x_q = q_ref[...]                                   # (bb*Lq, D) f32 — residual
    # Fold 1/temperature into q before the projection (scores come pre-scaled).
    xq_scaled = (x_q * inv_temperature).astype(bf16)

    # Head-fused projections: one full-width MXU call each (N = H*D), bf16
    # operands (k/v already bf16 from HBM), f32 accumulation, bf16 for reuse.
    q_all = jnp.dot(xq_scaled, wq_ref[...], preferred_element_type=f32).astype(bf16)
    k_all = jnp.dot(k_ref[...], wk_ref[...], preferred_element_type=f32).astype(bf16)
    v_all = jnp.dot(v_ref[...], wv_ref[...], preferred_element_type=f32).astype(bf16)

    # TODO(synk): at realistic H / batch_block replace these unrolled Python
    # loops with lax.fori_loop(..., unroll=2) + a (bb*Lq, H*D) VMEM scratch for
    # the concatenated head outputs, to bound vreg live ranges (review item on
    # register pressure).  At H = bb = 2 full unrolling is fine.
    o_rows = []
    for j in range(batch_block):                       # static (unrolled)
        m = mask_ref[j].astype(f32)                    # (Lq, Lk)
        q_b = q_all[j * Lq:(j + 1) * Lq]               # (Lq, H*D) static slices
        k_b = k_all[j * Lk:(j + 1) * Lk]
        v_b = v_all[j * Lk:(j + 1) * Lk]
        o_heads = []
        for h in range(H):                             # static (unrolled)
            q_h = q_b[:, h * D:(h + 1) * D]
            k_h = k_b[:, h * D:(h + 1) * D]
            v_h = v_b[:, h * D:(h + 1) * D]
            # scores = q_h @ k_h^T, contracting dim 1 with dim 1 (no XLU .T).
            scores = lax.dot_general(q_h, k_h, (((1,), (1,)), ((), ())),
                                     preferred_element_type=f32)   # (Lq, Lk)
            # GATA masked_softmax: clamp -> mask -> exp -> re-mask -> normalize.
            s = jnp.clip(scores, -15.0, 15.0) * m
            z = s - jnp.max(s, axis=-1, keepdims=True)
            # bf16 exp (EUP) on v6e/v7x; denominator accumulates in f32.
            e = jnp.exp(z.astype(exp_dtype)).astype(f32) * m
            denom = jnp.sum(e, axis=-1, keepdims=True) + 1e-6
            inv_fast = pl.reciprocal(denom, approx=True)   # EUP slot
            p = (e * inv_fast).astype(bf16)                # probs for value matmul
            if attn_ref is not None:
                if exact_attn_recip:
                    # Exact reciprocal for the stored f32 probabilities so rows
                    # sum to 1 at f32 accuracy (review correctness concern).
                    attn_ref[h, j] = (e * pl.reciprocal(denom, approx=False)
                                      ).astype(attn_ref.dtype)
                else:
                    attn_ref[h, j] = p.astype(attn_ref.dtype)
            o_heads.append(jnp.dot(p, v_h, preferred_element_type=f32))  # (Lq, D)
        o_rows.append(jnp.concatenate(o_heads, axis=-1))   # (Lq, H*D)
    o_cat = jnp.concatenate(o_rows, axis=0).astype(bf16)   # (bb*Lq, H*D)

    # fc (single matmul across all heads) + bias + residual + LayerNorm(1e-5).
    y = (jnp.dot(o_cat, wfc_ref[...], preferred_element_type=f32)
         + bfc_ref[...] + x_q)
    mu = jnp.mean(y, axis=-1, keepdims=True)
    var = jnp.mean(jnp.square(y - mu), axis=-1, keepdims=True)
    yn = (y - mu) * lax.rsqrt(var + 1e-5)
    out_ref[...] = (yn * gamma_ref[...] + beta_ref[...]).astype(out_ref.dtype)


# ----------------------------------------------------------------------------
# Wrapper: one pallas_call for the whole forward pass.
# ----------------------------------------------------------------------------
def self_attention_forward(params, q, mask, k, v, n_head, block_hidden_dim, *,
                           batch_block=None, return_attn=True,
                           attn_dtype=jnp.bfloat16, exp_dtype=jnp.bfloat16):
    B, Lq, D = q.shape
    Lk = k.shape[1]
    Lv = v.shape[1]
    H = n_head
    assert D == block_hidden_dim and Lv == Lk
    bb = B if batch_block is None else batch_block     # default: whole batch/step
    assert B % bb == 0
    nsteps = B // bb
    inv_temperature = 1.0 / (float(D) ** 0.5)
    bf16 = jnp.bfloat16

    # bf16 operands straight from HBM (halves k/v/mask/weight DMA); q stays f32
    # (residual / LayerNorm path).  Reshapes are free row-major views.
    q2 = q.reshape(B * Lq, D)
    k2 = k.astype(bf16).reshape(B * Lk, D)
    v2 = v.astype(bf16).reshape(B * Lv, D)
    mask_b = mask.astype(bf16)                          # 0/1 mask is exact in bf16
    w_qs = params["w_qs"].astype(bf16)                  # (D, H*D)
    w_ks = params["w_ks"].astype(bf16)
    w_vs = params["w_vs"].astype(bf16)
    w_fc = params["w_fc"].astype(bf16)                  # (H*D, D)

    exact_attn_recip = jnp.result_type(attn_dtype) == jnp.result_type(jnp.float32)

    kernel = functools.partial(
        _self_attention_kernel,
        n_head=H, head_dim=D, len_q=Lq, len_k=Lk, batch_block=bb,
        inv_temperature=inv_temperature, exp_dtype=exp_dtype,
        exact_attn_recip=exact_attn_recip)

    # Weights have constant index maps (resident across grid steps); when the
    # grid has >1 step a single buffer suffices (no point double-buffering a
    # block whose index never changes).  With the default single-step grid the
    # pipeline_mode is moot, so it is omitted there.
    w_mode = dict(pipeline_mode=pl.Buffered(1)) if nsteps > 1 else {}

    in_specs = [
        pl.BlockSpec((bb * Lq, D), lambda i: (i, 0)),           # q   (f32)
        pl.BlockSpec((bb * Lk, D), lambda i: (i, 0)),           # k   (bf16)
        pl.BlockSpec((bb * Lv, D), lambda i: (i, 0)),           # v   (bf16)
        pl.BlockSpec((bb, Lq, Lk), lambda i: (i, 0, 0)),        # mask (bf16)
        pl.BlockSpec((D, H * D), lambda i: (0, 0), **w_mode),   # w_qs (resident)
        pl.BlockSpec((D, H * D), lambda i: (0, 0), **w_mode),   # w_ks
        pl.BlockSpec((D, H * D), lambda i: (0, 0), **w_mode),   # w_vs
        pl.BlockSpec((H * D, D), lambda i: (0, 0), **w_mode),   # w_fc
        pl.BlockSpec((1, D), lambda i: (0, 0)),                 # b_fc  (f32)
        pl.BlockSpec((1, D), lambda i: (0, 0)),                 # gamma (f32)
        pl.BlockSpec((1, D), lambda i: (0, 0)),                 # beta  (f32)
    ]
    out_specs = [pl.BlockSpec((bb * Lq, D), lambda i: (i, 0))]  # (B*Lq, D) slab
    out_shape = [jax.ShapeDtypeStruct((B * Lq, D), jnp.float32)]
    if return_attn:
        # (H, B, Lq, Lk): the module's (H*B, Lq, Lk) is a free row-major reshape
        # (index = h*B + b).  Trailing dim Lk is lane-dense once Lk >= 128
        # (production); repacking to (B, Lq, H*Lk) would need a wrapper-side HBM
        # transpose to recover the module layout, so the bandwidth levers used
        # here are bf16 storage (default) and return_attn=False.
        out_specs.append(pl.BlockSpec((H, bb, Lq, Lk), lambda i: (0, i, 0, 0)))
        out_shape.append(jax.ShapeDtypeStruct((H, B, Lq, Lk), attn_dtype))

    results = pl.pallas_call(
        kernel,
        grid=(nsteps,),
        in_specs=in_specs,
        out_specs=out_specs,
        out_shape=out_shape,
        compiler_params=pltpu.CompilerParams(
            # Single-TC chips run nsteps=1 by default (no serial-loop overhead);
            # pass batch_block=B//2 on v7x to feed both TensorCores in parallel.
            dimension_semantics=("parallel",),
            # 48 MiB leaves headroom under v7x's 64 MiB physical VMEM while
            # sitting above the 16/32 MiB scoped defaults on v5e/v6e.
            vmem_limit_bytes=48 * 1024 * 1024,
        ),
    )(q2, k2, v2, mask_b, w_qs, w_ks, w_vs, w_fc,
      params["b_fc"], params["gamma"], params["beta"])

    out = results[0].reshape(B, Lq, D)
    attn = results[1].reshape(H * B, Lq, Lk) if return_attn else None
    return out, attn


# ----------------------------------------------------------------------------
# Pure-JAX f32 reference (ground truth for the correctness check).
# ----------------------------------------------------------------------------
def reference_forward(params, q, mask, k, v, n_head, block_hidden_dim):
    B, Lq, D = q.shape
    Lk = k.shape[1]
    H = n_head
    temperature = float(D) ** 0.5
    residual = q

    def project(x, w, L):
        y = (x.reshape(B * L, D) @ w).reshape(B, L, H, D).transpose(2, 0, 1, 3)
        return y.reshape(H * B, L, D)

    qh = project(q, params["w_qs"], Lq)
    kh = project(k, params["w_ks"], Lk)
    vh = project(v, params["w_vs"], Lk)
    mask_h = jnp.tile(mask.astype(jnp.float32), (H, 1, 1))
    scores = jnp.einsum("bqd,bkd->bqk", qh, kh) / temperature
    x = jnp.clip(scores, -15.0, 15.0) * mask_h
    e_x = jnp.exp(x - jnp.max(x, axis=-1, keepdims=True)) * mask_h
    attn = e_x / (jnp.sum(e_x, axis=-1, keepdims=True) + 1e-6)
    out = jnp.einsum("bqk,bkd->bqd", attn, vh)
    out = out.reshape(H, B, Lq, D).transpose(1, 2, 0, 3).reshape(B, Lq, H * D)
    y = out @ params["w_fc"] + params["b_fc"][0] + residual
    mean = jnp.mean(y, -1, keepdims=True)
    var = jnp.mean(jnp.square(y - mean), -1, keepdims=True)
    y = (y - mean) / jnp.sqrt(var + 1e-5) * params["gamma"][0] + params["beta"][0]
    return y, attn


if __name__ == "__main__":
    B, L, D, H = 2, 8, 32, 2
    key = jax.random.PRNGKey(0)
    k0, k1, k2, k3, k4, k5, k6, k7 = jax.random.split(key, 8)

    std_qkv = (2.0 / (D * 2)) ** 0.5
    std_fc = (2.0 / (H * D + D)) ** 0.5
    params = {
        # stored as (in_dim, out_dim) so the math is x @ w (torch Linear weight.T)
        "w_qs": jax.random.normal(k0, (D, H * D), jnp.float32) * std_qkv,
        "w_ks": jax.random.normal(k1, (D, H * D), jnp.float32) * std_qkv,
        "w_vs": jax.random.normal(k2, (D, H * D), jnp.float32) * std_qkv,
        "w_fc": jax.random.normal(k3, (H * D, D), jnp.float32) * std_fc,
        "b_fc": jnp.zeros((1, D), jnp.float32),
        "gamma": jnp.ones((1, D), jnp.float32),
        "beta": jnp.zeros((1, D), jnp.float32),
    }

    q = jax.random.normal(k4, (B, L, D), jnp.float32)
    k_in = jax.random.normal(k5, (B, L, D), jnp.float32)
    v_in = jax.random.normal(k6, (B, L, D), jnp.float32)
    # binary mask (B, Lq, Lk): keep some positions, zero others
    mask = (jax.random.uniform(k7, (B, L, L)) > 0.2).astype(jnp.float32)

    out, attn = self_attention_forward(params, q, mask, k_in, v_in, H, D)
    out = jax.block_until_ready(out)
    attn = jax.block_until_ready(attn)

    want_out, want_attn = reference_forward(params, q, mask, k_in, v_in, H, D)
    assert out.shape == (B, L, D) and attn.shape == (H * B, L, L)
    assert attn.dtype == jnp.bfloat16
    # Tolerances account for bf16 MXU operands, bf16 exp and bf16 attn storage
    # (all with f32 accumulation); expected error is O(1e-2) at these scales.
    assert jnp.allclose(out, want_out, atol=5e-2, rtol=5e-2)
    assert jnp.allclose(attn.astype(jnp.float32), want_attn, atol=3e-2, rtol=3e-2)

    # Exercise the production path that skips the largest HBM write entirely.
    out_noattn, attn_none = self_attention_forward(
        params, q, mask, k_in, v_in, H, D, return_attn=False)
    out_noattn = jax.block_until_ready(out_noattn)
    assert attn_none is None
    assert jnp.allclose(out_noattn, want_out, atol=5e-2, rtol=5e-2)

    print("KERNEL_OK")
</pallas_src>

<mosaic_0001>
module attributes {stable_mosaic.version = 11 : i64} {
  func.func @_self_attention_kernel(%arg0: i32, %arg1: memref<16x32xf32, #tpu.memory_space<vmem>>, %arg2: memref<16x32xbf16, #tpu.memory_space<vmem>>, %arg3: memref<16x32xbf16, #tpu.memory_space<vmem>>, %arg4: memref<2x8x8xbf16, #tpu.memory_space<vmem>>, %arg5: memref<32x64xbf16, #tpu.memory_space<vmem>>, %arg6: memref<32x64xbf16, #tpu.memory_space<vmem>>, %arg7: memref<32x64xbf16, #tpu.memory_space<vmem>>, %arg8: memref<64x32xbf16, #tpu.memory_space<vmem>>, %arg9: memref<1x32xf32, #tpu.memory_space<vmem>>, %arg10: memref<1x32xf32, #tpu.memory_space<vmem>>, %arg11: memref<1x32xf32, #tpu.memory_space<vmem>>, %arg12: memref<16x32xf32, #tpu.memory_space<vmem>>, %arg13: memref<2x2x8x8xbf16, #tpu.memory_space<vmem>>) attributes {dimension_semantics = [#tpu.dimension_semantics<parallel>], iteration_bounds = array<i64: 1>, scalar_prefetch = 0 : i64, scratch_operands = 0 : i64, tpu.core_type = #tpu.core_type<tc>, window_params = [{transform_indices = @transform_0, window_bounds = array<i64: 16, 32>}, {transform_indices = @transform_1, window_bounds = array<i64: 16, 32>}, {transform_indices = @transform_2, window_bounds = array<i64: 16, 32>}, {transform_indices = @transform_3, window_bounds = array<i64: 2, 8, 8>}, {pipeline_mode = #tpu.pipeline_mode<synchronous>, transform_indices = @transform_4, window_bounds = array<i64: 32, 64>}, {pipeline_mode = #tpu.pipeline_mode<synchronous>, transform_indices = @transform_5, window_bounds = array<i64: 32, 64>}, {pipeline_mode = #tpu.pipeline_mode<synchronous>, transform_indices = @transform_6, window_bounds = array<i64: 32, 64>}, {pipeline_mode = #tpu.pipeline_mode<synchronous>, transform_indices = @transform_7, window_bounds = array<i64: 64, 32>}, {pipeline_mode = #tpu.pipeline_mode<synchronous>, transform_indices = @transform_8, window_bounds = array<i64: 1, 32>}, {pipeline_mode = #tpu.pipeline_mode<synchronous>, transform_indices = @transform_9, window_bounds = array<i64: 1, 32>}, {pipeline_mode = #tpu.pipeline_mode<synchronous>, transform_indices = @transform_10, window_bounds = array<i64: 1, 32>}, {transform_indices = @transform_11, window_bounds = array<i64: 16, 32>}, {transform_indices = @transform_12, window_bounds = array<i64: 2, 2, 8, 8>}]} {
    %c0 = arith.constant 0 : index
    %c0_0 = arith.constant 0 : index
    %0 = vector.load %arg1[%c0, %c0_0] : memref<16x32xf32, #tpu.memory_space<vmem>>, vector<16x32xf32>
    %cst = arith.constant 0.176776692 : f32
    %1 = vector.broadcast %cst : f32 to vector<16x32xf32>
    %2 = arith.mulf %0, %1 : vector<16x32xf32>
    %3 = arith.truncf %2 : vector<16x32xf32> to vector<16x32xbf16>
    %c0_1 = arith.constant 0 : index
    %c0_2 = arith.constant 0 : index
    %4 = vector.load %arg5[%c0_1, %c0_2] : memref<32x64xbf16, #tpu.memory_space<vmem>>, vector<32x64xbf16>
    %cst_3 = arith.constant dense<0.000000e+00> : vector<16x64xf32>
    %5 = tpu.matmul %3, %4, %cst_3 {dimension_numbers = #tpu.dot_dimension_numbers<[1], [0], [0], [1], [0, 0, 1, 1], [], []>} : vector<16x32xbf16>, vector<32x64xbf16>, vector<16x64xf32> -> vector<16x64xf32>
    %6 = arith.truncf %5 : vector<16x64xf32> to vector<16x64xbf16>
    %c0_4 = arith.constant 0 : index
    %c0_5 = arith.constant 0 : index
    %7 = vector.load %arg2[%c0_4, %c0_5] : memref<16x32xbf16, #tpu.memory_space<vmem>>, vector<16x32xbf16>
    %c0_6 = arith.constant 0 : index
    %c0_7 = arith.constant 0 : index
    %8 = vector.load %arg6[%c0_6, %c0_7] : memref<32x64xbf16, #tpu.memory_space<vmem>>, vector<32x64xbf16>
    %cst_8 = arith.constant dense<0.000000e+00> : vector<16x64xf32>
    %9 = tpu.matmul %7, %8, %cst_8 {dimension_numbers = #tpu.dot_dimension_numbers<[1], [0], [0], [1], [0, 0, 1, 1], [], []>} : vector<16x32xbf16>, vector<32x64xbf16>, vector<16x64xf32> -> vector<16x64xf32>
    %10 = arith.truncf %9 : vector<16x64xf32> to vector<16x64xbf16>
    %c0_9 = arith.constant 0 : index
    %c0_10 = arith.constant 0 : index
    %11 = vector.load %arg3[%c0_9, %c0_10] : memref<16x32xbf16, #tpu.memory_space<vmem>>, vector<16x32xbf16>
    %c0_11 = arith.constant 0 : index
    %c0_12 = arith.constant 0 : index
    %12 = vector.load %arg7[%c0_11, %c0_12] : memref<32x64xbf16, #tpu.memory_space<vmem>>, vector<32x64xbf16>
    %cst_13 = arith.constant dense<0.000000e+00> : vector<16x64xf32>
    %13 = tpu.matmul %11, %12, %cst_13 {dimension_numbers = #tpu.dot_dimension_numbers<[1], [0], [0], [1], [0, 0, 1, 1], [], []>} : vector<16x32xbf16>, vector<32x64xbf16>, vector<16x64xf32> -> vector<16x64xf32>
    %14 = arith.truncf %13 : vector<16x64xf32> to vector<16x64xbf16>
    %c0_14 = arith.constant 0 : index
    %c0_15 = arith.constant 0 : index
    %c0_16 = arith.constant 0 : index
    %15 = vector.load %arg4[%c0_14, %c0_15, %c0_16] : memref<2x8x8xbf16, #tpu.memory_space<vmem>>, vector<1x8x8xbf16>
    %16 = vector.shape_cast %15 : vector<1x8x8xbf16> to vector<8x8xbf16>
    %17 = arith.extf %16 : vector<8x8xbf16> to vector<8x8xf32>
    %18 = vector.extract_strided_slice %6 {offsets = [0, 0], sizes = [8, 64], strides = [1, 1]} : vector<16x64xbf16> to vector<8x64xbf16>
    %19 = vector.extract_strided_slice %10 {offsets = [0, 0], sizes = [8, 64], strides = [1, 1]} : vector<16x64xbf16> to vector<8x64xbf16>
    %20 = vector.extract_strided_slice %14 {offsets = [0, 0], sizes = [8, 64], strides = [1, 1]} : vector<16x64xbf16> to vector<8x64xbf16>
    %21 = vector.extract_strided_slice %18 {offsets = [0, 0], sizes = [8, 32], strides = [1, 1]} : vector<8x64xbf16> to vector<8x32xbf16>
    %22 = vector.extract_strided_slice %19 {offsets = [0, 0], sizes = [8, 32], strides = [1, 1]} : vector<8x64xbf16> to vector<8x32xbf16>
    %23 = vector.extract_strided_slice %20 {offsets = [0, 0], sizes = [8, 32], strides = [1, 1]} : vector<8x64xbf16> to vector<8x32xbf16>
    %cst_17 = arith.constant dense<0.000000e+00> : vector<8x8xf32>
    %24 = tpu.matmul %21, %22, %cst_17 {dimension_numbers = #tpu.dot_dimension_numbers<[1], [1], [0], [0], [0, 0, 1, 0], [], []>} : vector<8x32xbf16>, vector<8x32xbf16>, vector<8x8xf32> -> vector<8x8xf32>
    %cst_18 = arith.constant -1.500000e+01 : f32
    %cst_19 = arith.constant 1.500000e+01 : f32
    %25 = vector.broadcast %cst_18 : f32 to vector<8x8xf32>
    %26 = arith.maximumf %25, %24 : vector<8x8xf32>
    %27 = vector.broadcast %cst_19 : f32 to vector<8x8xf32>
    %28 = arith.minimumf %27, %26 : vector<8x8xf32>
    %29 = arith.mulf %28, %17 : vector<8x8xf32>
    %cst_20 = arith.constant dense<0xFF800000> : vector<8xf32>
    %30 = vector.multi_reduction <maximumf>, %29, %cst_20 [1] : vector<8x8xf32> to vector<8xf32>
    %31 = vector.shape_cast %30 : vector<8xf32> to vector<8x1xf32>
    %32 = vector.broadcast %31 : vector<8x1xf32> to vector<8x8xf32>
    %33 = arith.subf %29, %32 : vector<8x8xf32>
    %34 = arith.truncf %33 : vector<8x8xf32> to vector<8x8xbf16>
    %35 = math.exp %34 : vector<8x8xbf16>
    %36 = arith.extf %35 : vector<8x8xbf16> to vector<8x8xf32>
    %37 = arith.mulf %36, %17 : vector<8x8xf32>
    %cst_21 = arith.constant dense<0.000000e+00> : vector<8xf32>
    %38 = vector.multi_reduction <add>, %37, %cst_21 [1] : vector<8x8xf32> to vector<8xf32>
    %39 = vector.shape_cast %38 : vector<8xf32> to vector<8x1xf32>
    %cst_22 = arith.constant 9.99999997E-7 : f32
    %40 = vector.broadcast %cst_22 : f32 to vector<8x1xf32>
    %41 = arith.addf %39, %40 : vector<8x1xf32>
    %42 = tpu.reciprocal %41 {approx = true} : vector<8x1xf32> -> vector<8x1xf32>
    %43 = vector.broadcast %42 : vector<8x1xf32> to vector<8x8xf32>
    %44 = arith.mulf %37, %43 : vector<8x8xf32>
    %45 = arith.truncf %44 : vector<8x8xf32> to vector<8x8xbf16>
    %c0_23 = arith.constant 0 : index
    %c0_24 = arith.constant 0 : index
    %c0_25 = arith.constant 0 : index
    %c0_26 = arith.constant 0 : index
    %46 = vector.load %arg13[%c0_23, %c0_24, %c0_25, %c0_26] : memref<2x2x8x8xbf16, #tpu.memory_space<vmem>>, vector<1x1x8x8xbf16>
    %47 = vector.shape_cast %46 : vector<1x1x8x8xbf16> to vector<8x8xbf16>
    %48 = vector.shape_cast %45 : vector<8x8xbf16> to vector<1x1x8x8xbf16>
    tpu.vector_store %arg13[%c0_23, %c0_24, %c0_25, %c0_26], %48 {strides = array<i32>} : memref<2x2x8x8xbf16, #tpu.memory_space<vmem>>, vector<1x1x8x8xbf16>,
    %cst_27 = arith.constant dense<0.000000e+00> : vector<8x32xf32>
    %49 = tpu.matmul %45, %23, %cst_27 {dimension_numbers = #tpu.dot_dimension_numbers<[1], [0], [0], [1], [0, 0, 1, 1], [], []>} : vector<8x8xbf16>, vector<8x32xbf16>, vector<8x32xf32> -> vector<8x32xf32>
    %50 = vector.extract_strided_slice %18 {offsets = [0, 32], sizes = [8, 32], strides = [1, 1]} : vector<8x64xbf16> to vector<8x32xbf16>
    %51 = vector.extract_strided_slice %19 {offsets = [0, 32], sizes = [8, 32], strides = [1, 1]} : vector<8x64xbf16> to vector<8x32xbf16>
    %52 = vector.extract_strided_slice %20 {offsets = [0, 32], sizes = [8, 32], strides = [1, 1]} : vector<8x64xbf16> to vector<8x32xbf16>
    %cst_28 = arith.constant dense<0.000000e+00> : vector<8x8xf32>
    %53 = tpu.matmul %50, %51, %cst_28 {dimension_numbers = #tpu.dot_dimension_numbers<[1], [1], [0], [0], [0, 0, 1, 0], [], []>} : vector<8x32xbf16>, vector<8x32xbf16>, vector<8x8xf32> -> vector<8x8xf32>
    %cst_29 = arith.constant -1.500000e+01 : f32
    %cst_30 = arith.constant 1.500000e+01 : f32
    %54 = vector.broadcast %cst_29 : f32 to vector<8x8xf32>
    %55 = arith.maximumf %54, %53 : vector<8x8xf32>
    %56 = vector.broadcast %cst_30 : f32 to vector<8x8xf32>
    %57 = arith.minimumf %56, %55 : vector<8x8xf32>
    %58 = arith.mulf %57, %17 : vector<8x8xf32>
    %cst_31 = arith.constant dense<0xFF800000> : vector<8xf32>
    %59 = vector.multi_reduction <maximumf>, %58, %cst_31 [1] : vector<8x8xf32> to vector<8xf32>
    %60 = vector.shape_cast %59 : vector<8xf32> to vector<8x1xf32>
    %61 = vector.broadcast %60 : vector<8x1xf32> to vector<8x8xf32>
    %62 = arith.subf %58, %61 : vector<8x8xf32>
    %63 = arith.truncf %62 : vector<8x8xf32> to vector<8x8xbf16>
    %64 = math.exp %63 : vector<8x8xbf16>
    %65 = arith.extf %64 : vector<8x8xbf16> to vector<8x8xf32>
    %66 = arith.mulf %65, %17 : vector<8x8xf32>
    %cst_32 = arith.constant dense<0.000000e+00> : vector<8xf32>
    %67 = vector.multi_reduction <add>, %66, %cst_32 [1] : vector<8x8xf32> to vector<8xf32>
    %68 = vector.shape_cast %67 : vector<8xf32> to vector<8x1xf32>
    %cst_33 = arith.constant 9.99999997E-7 : f32
    %69 = vector.broadcast %cst_33 : f32 to vector<8x1xf32>
    %70 = arith.addf %68, %69 : vector<8x1xf32>
    %71 = tpu.reciprocal %70 {approx = true} : vector<8x1xf32> -> vector<8x1xf32>
    %72 = vector.broadcast %71 : vector<8x1xf32> to vector<8x8xf32>
    %73 = arith.mulf %66, %72 : vector<8x8xf32>
    %74 = arith.truncf %73 : vector<8x8xf32> to vector<8x8xbf16>
    %c1 = arith.constant 1 : index
    %c0_34 = arith.constant 0 : index
    %c0_35 = arith.constant 0 : index
    %c0_36 = arith.constant 0 : index
    %75 = vector.load %arg13[%c1, %c0_34, %c0_35, %c0_36] : memref<2x2x8x8xbf16, #tpu.memory_space<vmem>>, vector<1x1x8x8xbf16>
    %76 = vector.shape_cast %75 : vector<1x1x8x8xbf16> to vector<8x8xbf16>
    %77 = vector.shape_cast %74 : vector<8x8xbf16> to vector<1x1x8x8xbf16>
    tpu.vector_store %arg13[%c1, %c0_34, %c0_35, %c0_36], %77 {strides = array<i32>} : memref<2x2x8x8xbf16, #tpu.memory_space<vmem>>, vector<1x1x8x8xbf16>,
    %cst_37 = arith.constant dense<0.000000e+00> : vector<8x32xf32>
    %78 = tpu.matmul %74, %52, %cst_37 {dimension_numbers = #tpu.dot_dimension_numbers<[1], [0], [0], [1], [0, 0, 1, 1], [], []>} : vector<8x8xbf16>, vector<8x32xbf16>, vector<8x32xf32> -> vector<8x32xf32>
    %79 = tpu.concatenate %49, %78 in 1 : vector<8x32xf32>, vector<8x32xf32> -> vector<8x64xf32>
    %c1_38 = arith.constant 1 : index
    %c0_39 = arith.constant 0 : index
    %c0_40 = arith.constant 0 : index
    %80 = vector.load %arg4[%c1_38, %c0_39, %c0_40] : memref<2x8x8xbf16, #tpu.memory_space<vmem>>, vector<1x8x8xbf16>
    %81 = vector.shape_cast %80 : vector<1x8x8xbf16> to vector<8x8xbf16>
    %82 = arith.extf %81 : vector<8x8xbf16> to vector<8x8xf32>
    %83 = vector.extract_strided_slice %6 {offsets = [8, 0], sizes = [8, 64], strides = [1, 1]} : vector<16x64xbf16> to vector<8x64xbf16>
    %84 = vector.extract_strided_slice %10 {offsets = [8, 0], sizes = [8, 64], strides = [1, 1]} : vector<16x64xbf16> to vector<8x64xbf16>
    %85 = vector.extract_strided_slice %14 {offsets = [8, 0], sizes = [8, 64], strides = [1, 1]} : vector<16x64xbf16> to vector<8x64xbf16>
    %86 = vector.extract_strided_slice %83 {offsets = [0, 0], sizes = [8, 32], strides = [1, 1]} : vector<8x64xbf16> to vector<8x32xbf16>
    %87 = vector.extract_strided_slice %84 {offsets = [0, 0], sizes = [8, 32], strides = [1, 1]} : vector<8x64xbf16> to vector<8x32xbf16>
    %88 = vector.extract_strided_slice %85 {offsets = [0, 0], sizes = [8, 32], strides = [1, 1]} : vector<8x64xbf16> to vector<8x32xbf16>
    %cst_41 = arith.constant dense<0.000000e+00> : vector<8x8xf32>
    %89 = tpu.matmul %86, %87, %cst_41 {dimension_numbers = #tpu.dot_dimension_numbers<[1], [1], [0], [0], [0, 0, 1, 0], [], []>} : vector<8x32xbf16>, vector<8x32xbf16>, vector<8x8xf32> -> vector<8x8xf32>
    %cst_42 = arith.constant -1.500000e+01 : f32
    %cst_43 = arith.constant 1.500000e+01 : f32
    %90 = vector.broadcast %cst_42 : f32 to vector<8x8xf32>
    %91 = arith.maximumf %90, %89 : vector<8x8xf32>
    %92 = vector.broadcast %cst_43 : f32 to vector<8x8xf32>
    %93 = arith.minimumf %92, %91 : vector<8x8xf32>
    %94 = arith.mulf %93, %82 : vector<8x8xf32>
    %cst_44 = arith.constant dense<0xFF800000> : vector<8xf32>
    %95 = vector.multi_reduction <maximumf>, %94, %cst_44 [1] : vector<8x8xf32> to vector<8xf32>
    %96 = vector.shape_cast %95 : vector<8xf32> to vector<8x1xf32>
    %97 = vector.broadcast %96 : vector<8x1xf32> to vector<8x8xf32>
    %98 = arith.subf %94, %97 : vector<8x8xf32>
    %99 = arith.truncf %98 : vector<8x8xf32> to vector<8x8xbf16>
    %100 = math.exp %99 : vector<8x8xbf16>
    %101 = arith.extf %100 : vector<8x8xbf16> to vector<8x8xf32>
    %102 = arith.mulf %101, %82 : vector<8x8xf32>
    %cst_45 = arith.constant dense<0.000000e+00> : vector<8xf32>
    %103 = vector.multi_reduction <add>, %102, %cst_45 [1] : vector<8x8xf32> to vector<8xf32>
    %104 = vector.shape_cast %103 : vector<8xf32> to vector<8x1xf32>
    %cst_46 = arith.constant 9.99999997E-7 : f32
    %105 = vector.broadcast %cst_46 : f32 to vector<8x1xf32>
    %106 = arith.addf %104, %105 : vector<8x1xf32>
    %107 = tpu.reciprocal %106 {approx = true} : vector<8x1xf32> -> vector<8x1xf32>
    %108 = vector.broadcast %107 : vector<8x1xf32> to vector<8x8xf32>
    %109 = arith.mulf %102, %108 : vector<8x8xf32>
    %110 = arith.truncf %109 : vector<8x8xf32> to vector<8x8xbf16>
    %c0_47 = arith.constant 0 : index
    %c1_48 = arith.constant 1 : index
    %c0_49 = arith.constant 0 : index
    %c0_50 = arith.constant 0 : index
    %111 = vector.load %arg13[%c0_47, %c1_48, %c0_49, %c0_50] : memref<2x2x8x8xbf16, #tpu.memory_space<vmem>>, vector<1x1x8x8xbf16>
    %112 = vector.shape_cast %111 : vector<1x1x8x8xbf16> to vector<8x8xbf16>
    %113 = vector.shape_cast %110 : vector<8x8xbf16> to vector<1x1x8x8xbf16>
    tpu.vector_store %arg13[%c0_47, %c1_48, %c0_49, %c0_50], %113 {strides = array<i32>} : memref<2x2x8x8xbf16, #tpu.memory_space<vmem>>, vector<1x1x8x8xbf16>,
    %cst_51 = arith.constant dense<0.000000e+00> : vector<8x32xf32>
    %114 = tpu.matmul %110, %88, %cst_51 {dimension_numbers = #tpu.dot_dimension_numbers<[1], [0], [0], [1], [0, 0, 1, 1], [], []>} : vector<8x8xbf16>, vector<8x32xbf16>, vector<8x32xf32> -> vector<8x32xf32>
    %115 = vector.extract_strided_slice %83 {offsets = [0, 32], sizes = [8, 32], strides = [1, 1]} : vector<8x64xbf16> to vector<8x32xbf16>
    %116 = vector.extract_strided_slice %84 {offsets = [0, 32], sizes = [8, 32], strides = [1, 1]} : vector<8x64xbf16> to vector<8x32xbf16>
    %117 = vector.extract_strided_slice %85 {offsets = [0, 32], sizes = [8, 32], strides = [1, 1]} : vector<8x64xbf16> to vector<8x32xbf16>
    %cst_52 = arith.constant dense<0.000000e+00> : vector<8x8xf32>
    %118 = tpu.matmul %115, %116, %cst_52 {dimension_numbers = #tpu.dot_dimension_numbers<[1], [1], [0], [0], [0, 0, 1, 0], [], []>} : vector<8x32xbf16>, vector<8x32xbf16>, vector<8x8xf32> -> vector<8x8xf32>
    %cst_53 = arith.constant -1.500000e+01 : f32
    %cst_54 = arith.constant 1.500000e+01 : f32
    %119 = vector.broadcast %cst_53 : f32 to vector<8x8xf32>
    %120 = arith.maximumf %119, %118 : vector<8x8xf32>
    %121 = vector.broadcast %cst_54 : f32 to vector<8x8xf32>
    %122 = arith.minimumf %121, %120 : vector<8x8xf32>
    %123 = arith.mulf %122, %82 : vector<8x8xf32>
    %cst_55 = arith.constant dense<0xFF800000> : vector<8xf32>
    %124 = vector.multi_reduction <maximumf>, %123, %cst_55 [1] : vector<8x8xf32> to vector<8xf32>
    %125 = vector.shape_cast %124 : vector<8xf32> to vector<8x1xf32>
    %126 = vector.broadcast %125 : vector<8x1xf32> to vector<8x8xf32>
    %127 = arith.subf %123, %126 : vector<8x8xf32>
    %128 = arith.truncf %127 : vector<8x8xf32> to vector<8x8xbf16>
    %129 = math.exp %128 : vector<8x8xbf16>
    %130 = arith.extf %129 : vector<8x8xbf16> to vector<8x8xf32>
    %131 = arith.mulf %130, %82 : vector<8x8xf32>
    %cst_56 = arith.constant dense<0.000000e+00> : vector<8xf32>
    %132 = vector.multi_reduction <add>, %131, %cst_56 [1] : vector<8x8xf32> to vector<8xf32>
    %133 = vector.shape_cast %132 : vector<8xf32> to vector<8x1xf32>
    %cst_57 = arith.constant 9.99999997E-7 : f32
    %134 = vector.broadcast %cst_57 : f32 to vector<8x1xf32>
    %135 = arith.addf %133, %134 : vector<8x1xf32>
    %136 = tpu.reciprocal %135 {approx = true} : vector<8x1xf32> -> vector<8x1xf32>
    %137 = vector.broadcast %136 : vector<8x1xf32> to vector<8x8xf32>
    %138 = arith.mulf %131, %137 : vector<8x8xf32>
    %139 = arith.truncf %138 : vector<8x8xf32> to vector<8x8xbf16>
    %c1_58 = arith.constant 1 : index
    %c1_59 = arith.constant 1 : index
    %c0_60 = arith.constant 0 : index
    %c0_61 = arith.constant 0 : index
    %140 = vector.load %arg13[%c1_58, %c1_59, %c0_60, %c0_61] : memref<2x2x8x8xbf16, #tpu.memory_space<vmem>>, vector<1x1x8x8xbf16>
    %141 = vector.shape_cast %140 : vector<1x1x8x8xbf16> to vector<8x8xbf16>
    %142 = vector.shape_cast %139 : vector<8x8xbf16> to vector<1x1x8x8xbf16>
    tpu.vector_store %arg13[%c1_58, %c1_59, %c0_60, %c0_61], %142 {strides = array<i32>} : memref<2x2x8x8xbf16, #tpu.memory_space<vmem>>, vector<1x1x8x8xbf16>,
    %cst_62 = arith.constant dense<0.000000e+00> : vector<8x32xf32>
    %143 = tpu.matmul %139, %117, %cst_62 {dimension_numbers = #tpu.dot_dimension_numbers<[1], [0], [0], [1], [0, 0, 1, 1], [], []>} : vector<8x8xbf16>, vector<8x32xbf16>, vector<8x32xf32> -> vector<8x32xf32>
    %144 = tpu.concatenate %114, %143 in 1 : vector<8x32xf32>, vector<8x32xf32> -> vector<8x64xf32>
    %145 = tpu.concatenate %79, %144 in 0 : vector<8x64xf32>, vector<8x64xf32> -> vector<16x64xf32>
    %146 = arith.truncf %145 : vector<16x64xf32> to vector<16x64xbf16>
    %c0_63 = arith.constant 0 : index
    %c0_64 = arith.constant 0 : index
    %147 = vector.load %arg8[%c0_63, %c0_64] : memref<64x32xbf16, #tpu.memory_space<vmem>>, vector<64x32xbf16>
    %cst_65 = arith.constant dense<0.000000e+00> : vector<16x32xf32>
    %148 = tpu.matmul %146, %147, %cst_65 {dimension_numbers = #tpu.dot_dimension_numbers<[1], [0], [0], [1], [0, 0, 1, 1], [], []>} : vector<16x64xbf16>, vector<64x32xbf16>, vector<16x32xf32> -> vector<16x32xf32>
    %c0_66 = arith.constant 0 : index
    %c0_67 = arith.constant 0 : index
    %149 = vector.load %arg9[%c0_66, %c0_67] : memref<1x32xf32, #tpu.memory_space<vmem>>, vector<1x32xf32>
    %150 = vector.broadcast %149 : vector<1x32xf32> to vector<16x32xf32>
    %151 = arith.addf %148, %150 : vector<16x32xf32>
    %152 = arith.addf %151, %0 : vector<16x32xf32>
    %cst_68 = arith.constant dense<0.000000e+00> : vector<16xf32>
    %153 = vector.multi_reduction <add>, %152, %cst_68 [1] : vector<16x32xf32> to vector<16xf32>
    %154 = vector.shape_cast %153 : vector<16xf32> to vector<16x1xf32>
    %cst_69 = arith.constant 3.200000e+01 : f32
    %155 = vector.broadcast %cst_69 : f32 to vector<16x1xf32>
    %156 = arith.divf %154, %155 : vector<16x1xf32>
    %157 = vector.broadcast %156 : vector<16x1xf32> to vector<16x32xf32>
    %158 = arith.subf %152, %157 : vector<16x32xf32>
    %159 = arith.mulf %158, %158 : vector<16x32xf32>
    %cst_70 = arith.constant dense<0.000000e+00> : vector<16xf32>
    %160 = vector.multi_reduction <add>, %159, %cst_70 [1] : vector<16x32xf32> to vector<16xf32>
    %161 = vector.shape_cast %160 : vector<16xf32> to vector<16x1xf32>
    %cst_71 = arith.constant 3.200000e+01 : f32
    %162 = vector.broadcast %cst_71 : f32 to vector<16x1xf32>
    %163 = arith.divf %161, %162 : vector<16x1xf32>
    %164 = vector.broadcast %156 : vector<16x1xf32> to vector<16x32xf32>
    %165 = arith.subf %152, %164 : vector<16x32xf32>
    %cst_72 = arith.constant 9.99999974E-6 : f32
    %166 = vector.broadcast %cst_72 : f32 to vector<16x1xf32>
    %167 = arith.addf %163, %166 : vector<16x1xf32>
    %168 = math.rsqrt %167 : vector<16x1xf32>
    %169 = vector.broadcast %168 : vector<16x1xf32> to vector<16x32xf32>
    %170 = arith.mulf %165, %169 : vector<16x32xf32>
    %c0_73 = arith.constant 0 : index
    %c0_74 = arith.constant 0 : index
    %171 = vector.load %arg10[%c0_73, %c0_74] : memref<1x32xf32, #tpu.memory_space<vmem>>, vector<1x32xf32>
    %172 = vector.broadcast %171 : vector<1x32xf32> to vector<16x32xf32>
    %173 = arith.mulf %170, %172 : vector<16x32xf32>
    %c0_75 = arith.constant 0 : index
    %c0_76 = arith.constant 0 : index
    %174 = vector.load %arg11[%c0_75, %c0_76] : memref<1x32xf32, #tpu.memory_space<vmem>>, vector<1x32xf32>
    %175 = vector.broadcast %174 : vector<1x32xf32> to vector<16x32xf32>
    %176 = arith.addf %173, %175 : vector<16x32xf32>
    %c0_77 = arith.constant 0 : index
    %c0_78 = arith.constant 0 : index
    %177 = vector.load %arg12[%c0_77, %c0_78] : memref<16x32xf32, #tpu.memory_space<vmem>>, vector<16x32xf32>
    tpu.vector_store %arg12[%c0_77, %c0_78], %176 {strides = array<i32>} : memref<16x32xf32, #tpu.memory_space<vmem>>, vector<16x32xf32>,
    return
  }
  func.func @transform_0(%arg0: i32) -> (i32, i32) {
    %c0_i32 = arith.constant 0 : i32
    %c0_i32_0 = arith.constant 0 : i32
    return %arg0, %c0_i32 : i32, i32
  }
  func.func @transform_1(%arg0: i32) -> (i32, i32) {
    %c0_i32 = arith.constant 0 : i32
    %c0_i32_0 = arith.constant 0 : i32
    return %arg0, %c0_i32 : i32, i32
  }
  func.func @transform_2(%arg0: i32) -> (i32, i32) {
    %c0_i32 = arith.constant 0 : i32
    %c0_i32_0 = arith.constant 0 : i32
    return %arg0, %c0_i32 : i32, i32
  }
  func.func @transform_3(%arg0: i32) -> (i32, i32, i32) {
    %c0_i32 = arith.constant 0 : i32
    %c0_i32_0 = arith.constant 0 : i32
    %c0_i32_1 = arith.constant 0 : i32
    return %arg0, %c0_i32, %c0_i32_0 : i32, i32, i32
  }
  func.func @transform_4(%arg0: i32) -> (i32, i32) {
    %c0_i32 = arith.constant 0 : i32
    %c0_i32_0 = arith.constant 0 : i32
    %c0_i32_1 = arith.constant 0 : i32
    return %c0_i32, %c0_i32_0 : i32, i32
  }
  func.func @transform_5(%arg0: i32) -> (i32, i32) {
    %c0_i32 = arith.constant 0 : i32
    %c0_i32_0 = arith.constant 0 : i32
    %c0_i32_1 = arith.constant 0 : i32
    return %c0_i32, %c0_i32_0 : i32, i32
  }
  func.func @transform_6(%arg0: i32) -> (i32, i32) {
    %c0_i32 = arith.constant 0 : i32
    %c0_i32_0 = arith.constant 0 : i32
    %c0_i32_1 = arith.constant 0 : i32
    return %c0_i32, %c0_i32_0 : i32, i32
  }
  func.func @transform_7(%arg0: i32) -> (i32, i32) {
    %c0_i32 = arith.constant 0 : i32
    %c0_i32_0 = arith.constant 0 : i32
    %c0_i32_1 = arith.constant 0 : i32
    return %c0_i32, %c0_i32_0 : i32, i32
  }
  func.func @transform_8(%arg0: i32) -> (i32, i32) {
    %c0_i32 = arith.constant 0 : i32
    %c0_i32_0 = arith.constant 0 : i32
    %c0_i32_1 = arith.constant 0 : i32
    return %c0_i32, %c0_i32_0 : i32, i32
  }
  func.func @transform_9(%arg0: i32) -> (i32, i32) {
    %c0_i32 = arith.constant 0 : i32
    %c0_i32_0 = arith.constant 0 : i32
    %c0_i32_1 = arith.constant 0 : i32
    return %c0_i32, %c0_i32_0 : i32, i32
  }
  func.func @transform_10(%arg0: i32) -> (i32, i32) {
    %c0_i32 = arith.constant 0 : i32
    %c0_i32_0 = arith.constant 0 : i32
    %c0_i32_1 = arith.constant 0 : i32
    return %c0_i32, %c0_i32_0 : i32, i32
  }
  func.func @transform_11(%arg0: i32) -> (i32, i32) {
    %c0_i32 = arith.constant 0 : i32
    %c0_i32_0 = arith.constant 0 : i32
    return %arg0, %c0_i32 : i32, i32
  }
  func.func @transform_12(%arg0: i32) -> (i32, i32, i32, i32) {
    %c0_i32 = arith.constant 0 : i32
    %c0_i32_0 = arith.constant 0 : i32
    %c0_i32_1 = arith.constant 0 : i32
    %c0_i32_2 = arith.constant 0 : i32
    return %c0_i32, %arg0, %c0_i32_0, %c0_i32_1 : i32, i32, i32, i32
  }
}

</mosaic_0001>

<llo_original>
// kernel: tpu_custom_call.1
$region0: #{tpu_custom_call.1}
  #allocation0 [shape = 'u32[]', space=smem, size = 0x4, offset = 0x4, fixed_abs, tag = 'smem constant byte address 0x4 - core index']
  #allocation1 [shape = 'u32[144,128]{1,0:T(1,128)}', space=vmem, size = 0x12000, scoped, tag = 'internal scratch']
  %s0 = inlined_call_operand.vmem [shape: f32[16,32], index: 0, kind: input, shape index: {}]
  %s1 = inlined_call_operand.hbm [shape: bf16[16,32], index: 1, kind: input, shape index: {}]
  %s2 = inlined_call_operand.hbm [shape: bf16[16,32], index: 2, kind: input, shape index: {}]
  %s3 = inlined_call_operand.vmem [shape: bf16[2,8,8], index: 3, kind: input, shape index: {}]
  %s4 = inlined_call_operand.vmem [shape: bf16[32,64], index: 4, kind: input, shape index: {}]
  %s5 = inlined_call_operand.vmem [shape: bf16[32,64], index: 5, kind: input, shape index: {}]
  %s6 = inlined_call_operand.hbm [shape: bf16[32,64], index: 6, kind: input, shape index: {}]
  %s7 = inlined_call_operand.vmem [shape: bf16[64,32], index: 7, kind: input, shape index: {}]
  %s8 = inlined_call_operand.vmem [shape: f32[1,32], index: 8, kind: input, shape index: {}]
  %s9 = inlined_call_operand.vmem [shape: f32[1,32], index: 9, kind: input, shape index: {}]
  %s10 = inlined_call_operand.vmem [shape: f32[1,32], index: 10, kind: input, shape index: {}]
  %s11 = inlined_call_operand.hbm [shape: f32[16,32], index: 11, kind: output, shape index: {0}]
  %s12 = inlined_call_operand.hbm [shape: bf16[2,2,8,8], index: 12, kind: output, shape index: {1}]
  %13 = xla_tuple %s11, %s12
  %s14 = sld [smem:[#allocation0]]
  $region74: #{tpu_custom_call.1} parent=0
    _
  %s16 = ssub.s32 1, %s14
  %s17 = scalar_select 0, %s16, %s14
  $region1: #{tpu_custom_call.1} parent=0
    #allocation2 [shape = 'u8[4096]{0}', space=vmem, size = 0x1000, scoped, tag = 'input window, operand 1, single buffered']
    #allocation3 [shape = 's32[1]{0}', space=sflag, size = 0x4, scoped, tag = 'scoped memory for tpu_custom_call.1']
    #allocation4 [shape = 's32[1]{0}', space=sflag, size = 0x4, scoped, tag = 'scoped memory for tpu_custom_call.1']
    #allocation5 [shape = 'u8[4096]{0}', space=vmem, size = 0x1000, scoped, tag = 'input window, operand 2, single buffered']
    #allocation6 [shape = 's32[1]{0}', space=sflag, size = 0x4, scoped, tag = 'scoped memory for tpu_custom_call.1']
    #allocation7 [shape = 'u8[8192]{0}', space=vmem, size = 0x2000, scoped, tag = 'input window, operand 6, single buffered']
    #allocation8 [shape = 'u8[8192]{0}', space=vmem, size = 0x2000, scoped, tag = 'output window, operand 0, single buffered']
    #allocation9 [shape = 'u8[8192]{0}', space=vmem, size = 0x2000, scoped, tag = 'output window, operand 1, single buffered']
    #allocation10 [shape = 's32[1]{0}', space=sflag, size = 0x4, scoped, tag = 'scoped memory for tpu_custom_call.1']
    %18 = vsyncpa [#allocation3], 0
    %19 = vsyncpa [#allocation6], 0
    %20 = vsyncpa [#allocation4], 0
    %21 = vsyncpa [#allocation10], 0
    // Predicated region
    $region2: #{tpu_custom_call.1} parent=1 // pred_check
      _
    $region3: #{tpu_custom_call.1} parent=1 // pred_check_branch
      %23 = sbr.rel (0) target = $region5
    $region4: #{tpu_custom_call.1} parent=1 // pred_region
      _
    $region5: #{tpu_custom_call.1} parent=1 // pred_fallthru
      _
    // Predicated region
    $region6: #{tpu_custom_call.1} parent=1 // pred_check
      _
    $region7: #{tpu_custom_call.1} parent=1 // pred_check_branch
      %25 = sbr.rel (0) target = $region9
    $region8: #{tpu_custom_call.1} parent=1 // pred_region
      %s27 = ssub.s32 128, 128
      %28 = vsyncadd [#allocation3], %s27
      %s29 = sshll.u32 [#allocation2], 4
      %s30 = int_to_ptr.vmem [resolvable:$true] %s29
      %35 = dma.hbm_to_vmem [thread:$0]  %s1, 128, %s30, [#allocation3], 64, 64, 4
    $region9: #{tpu_custom_call.1} parent=1 // pred_fallthru
      _
    // Predicated region
    $region10: #{tpu_custom_call.1} parent=1 // pred_check
      _
    $region11: #{tpu_custom_call.1} parent=1 // pred_check_branch
      %37 = sbr.rel (0) target = $region13
    $region12: #{tpu_custom_call.1} parent=1 // pred_region
      %s39 = ssub.s32 128, 128
      %40 = vsyncadd [#allocation6], %s39
      %s41 = sshll.u32 [#allocation5], 4
      %s42 = int_to_ptr.vmem [resolvable:$true] %s41
      %47 = dma.hbm_to_vmem [thread:$0]  %s2, 128, %s42, [#allocation6], 64, 64, 4
    $region13: #{tpu_custom_call.1} parent=1 // pred_fallthru
      _
    // Predicated region
    $region14: #{tpu_custom_call.1} parent=1 // pred_check
      _
    $region15: #{tpu_custom_call.1} parent=1 // pred_check_branch
      %49 = sbr.rel (0) target = $region17
    $region16: #{tpu_custom_call.1} parent=1 // pred_region
      _
    $region17: #{tpu_custom_call.1} parent=1 // pred_fallthru
      _
    // Predicated region
    $region18: #{tpu_custom_call.1} parent=1 // pred_check
      _
    $region19: #{tpu_custom_call.1} parent=1 // pred_check_branch
      %51 = sbr.rel (0) target = $region21
    $region20: #{tpu_custom_call.1} parent=1 // pred_region
      _
    $region21: #{tpu_custom_call.1} parent=1 // pred_fallthru
      _
    // Predicated region
    $region22: #{tpu_custom_call.1} parent=1 // pred_check
      _
    $region23: #{tpu_custom_call.1} parent=1 // pred_check_branch
      %53 = sbr.rel (0) target = $region25
    $region24: #{tpu_custom_call.1} parent=1 // pred_region
      _
    $region25: #{tpu_custom_call.1} parent=1 // pred_fallthru
      _
    // Predicated region
    $region26: #{tpu_custom_call.1} parent=1 // pred_check
      _
    $region27: #{tpu_custom_call.1} parent=1 // pred_check_branch
      %55 = sbr.rel (0) target = $region29
    $region28: #{tpu_custom_call.1} parent=1 // pred_region
      %s57 = ssub.s32 256, 256
      %58 = vsyncadd [#allocation6], %s57
      %s59 = sshll.u32 [#allocation7], 4
      %s60 = int_to_ptr.vmem [resolvable:$true] %s59
      %65 = dma.hbm_to_vmem [thread:$0]  %s6, 256, %s60, [#allocation6], 64, 64, 4
    $region29: #{tpu_custom_call.1} parent=1 // pred_fallthru
      _
    // Predicated region
    $region30: #{tpu_custom_call.1} parent=1 // pred_check
      _
    $region31: #{tpu_custom_call.1} parent=1 // pred_check_branch
      %67 = sbr.rel (0) target = $region33
    $region32: #{tpu_custom_call.1} parent=1 // pred_region
      _
    $region33: #{tpu_custom_call.1} parent=1 // pred_fallthru
      _
    // Predicated region
    $region34: #{tpu_custom_call.1} parent=1 // pred_check
      _
    $region35: #{tpu_custom_call.1} parent=1 // pred_check_branch
      %69 = sbr.rel (0) target = $region37
    $region36: #{tpu_custom_call.1} parent=1 // pred_region
      _
    $region37: #{tpu_custom_call.1} parent=1 // pred_fallthru
      _
    // Predicated region
    $region38: #{tpu_custom_call.1} parent=1 // pred_check
      _
    $region39: #{tpu_custom_call.1} parent=1 // pred_check_branch
      %71 = sbr.rel (0) target = $region41
    $region40: #{tpu_custom_call.1} parent=1 // pred_region
      _
    $region41: #{tpu_custom_call.1} parent=1 // pred_fallthru
      _
    // Predicated region
    $region42: #{tpu_custom_call.1} parent=1 // pred_check
      _
    $region43: #{tpu_custom_call.1} parent=1 // pred_check_branch
      %73 = sbr.rel (0) target = $region45
    $region44: #{tpu_custom_call.1} parent=1 // pred_region
      _
    $region45: #{tpu_custom_call.1} parent=1 // pred_fallthru
      _
    // Predicated region
    $region46: #{tpu_custom_call.1} parent=1 // pred_check
      _
    $region47: #{tpu_custom_call.1} parent=1 // pred_check_branch
      %75 = sbr.rel (0) target = $region49
    $region48: #{tpu_custom_call.1} parent=1 // pred_region
      %76 = dma.done [#allocation3], 128
    $region49: #{tpu_custom_call.1} parent=1 // pred_fallthru
      _
    // Predicated region
    $region50: #{tpu_custom_call.1} parent=1 // pred_check
      _
    $region51: #{tpu_custom_call.1} parent=1 // pred_check_branch
      %78 = sbr.rel (0) target = $region53
    $region52: #{tpu_custom_call.1} parent=1 // pred_region
      %79 = dma.done [#allocation6], 128
    $region53: #{tpu_custom_call.1} parent=1 // pred_fallthru
      _
    // Predicated region
    $region54: #{tpu_custom_call.1} parent=1 // pred_check
      _
    $region55: #{tpu_custom_call.1} parent=1 // pred_check_branch
      %81 = sbr.rel (0) target = $region57
    $region56: #{tpu_custom_call.1} parent=1 // pred_region
      %82 = dma.done [#allocation6], 256
    $region57: #{tpu_custom_call.1} parent=1 // pred_fallthru
      _
    %v84 = vld [vmem:[%s0] sm:$0xff]
    %v85 = vld [vmem:[%s0 + $0x8] sm:$0xff]
    %v86 = vmul.f32 %v84, 0.17677669
    %v87 = vmul.f32 %v85, 0.17677669
    %v88 = vpack.c.bf16 %v87, %v86
    %v89 = vld [vmem:[%s4] sm:$0xf]
    %v90 = vld [vmem:[%s4 + $0x4] sm:$0xf]
    %v91 = vld [vmem:[%s4 + $0x8] sm:$0xf]
    %v92 = vld [vmem:[%s4 + $0xc] sm:$0xf]
    %v97 = vunpack.c.l.b16 %v89
    %v98 = vunpack.c.l.b16 %v90
    %v99 = vunpack.c.l.b16 %v91
    %v100 = vunpack.c.l.b16 %v92
    %v101 = vpack.c.b16 %v98, %v97
    %v102 = vpack.c.b16 %v100, %v99
    %vm105 = vcmask 261120
    %v107 = vsel %vm105, %v88, 0
    %109 = vmatprep.subr.bf16.mxu0 0
    %110 = vmatpush1.bf16.msra.mxu0 %v101
    %111 = vmatprep.subr.bf16.mxu0 0
    %112 = vmatpush1.bf16.msra.mxu0 %v102
    %113 = vmatprep.subr.bf16.mxu0 0
    %114 = vmatpush1.bf16.msra.mxu0 0
    %115 = vmatprep.subr.bf16.mxu0 0
    %116 = vmatpush1.bf16.msra.mxu0 0
    %117 = vmatprep.subr.bf16.mxu0 0
    %118 = vmatpush1.bf16.msra.mxu0 0
    %119 = vmatprep.subr.bf16.mxu0 0
    %120 = vmatpush1.bf16.msra.mxu0 0
    %121 = vmatprep.subr.bf16.mxu0 0
    %122 = vmatpush1.bf16.msra.mxu0 0
    %123 = vmatprep.subr.bf16.mxu0 0
    %124 = vmatpush1.bf16.msra.mxu0 0
    %125 = vmatprep.subr.bf16.mxu0 0
    %126 = vmatpush1.bf16.msra.mxu0 0
    %127 = vmatprep.subr.bf16.mxu0 0
    %128 = vmatpush1.bf16.msra.mxu0 0
    %129 = vmatprep.subr.bf16.mxu0 0
    %130 = vmatpush1.bf16.msra.mxu0 0
    %131 = vmatprep.subr.bf16.mxu0 0
    %132 = vmatpush1.bf16.msra.mxu0 0
    %133 = vmatprep.subr.bf16.mxu0 0
    %134 = vmatpush1.bf16.msra.mxu0 0
    %135 = vmatprep.subr.bf16.mxu0 0
    %136 = vmatpush1.bf16.msra.mxu0 0
    %137 = vmatprep.subr.bf16.mxu0 0
    %138 = vmatpush1.bf16.msra.mxu0 0
    %139 = vmatprep.subr.bf16.mxu0 0
    %140 = vmatpush1.bf16.msra.mxu0 0
    %141 = vmatprep.mubr.bf16.mxu0 0
    %142 = vmatmul.mubr.bf16.gmra.mrb[0].mxu0 %v107
    %v143 = vpop.f32.mrb[0].mxu0
    %v144 = vadd.f32 0.0, %v143
    %v145 = vpop.f32.mrb[0].mxu0
    %v146 = vpop.f32.mrb[0].mxu0
    %v147 = vadd.f32 0.0, %v146
    %v148 = vpop.f32.mrb[0].mxu0
    %149 = vdwg.mxu0
    %v150 = vpack.c.bf16 %v147, %v144
    %v151 = vld [vmem:[#allocation2] sm:$0xf]
    %v152 = vld [vmem:[#allocation2 + $0x4] sm:$0xf]
    %v153 = vld [vmem:[%s5] sm:$0xf]
    %v154 = vld [vmem:[%s5 + $0x4] sm:$0xf]
    %v155 = vld [vmem:[%s5 + $0x8] sm:$0xf]
    %v156 = vld [vmem:[%s5 + $0xc] sm:$0xf]
    %v159 = vunpack.c.l.b16 %v151
    %v160 = vunpack.c.l.b16 %v152
    %v161 = vpack.c.b16 %v160, %v159
    %v166 = vunpack.c.l.b16 %v153
    %v167 = vunpack.c.l.b16 %v154
    %v168 = vunpack.c.l.b16 %v155
    %v169 = vunpack.c.l.b16 %v156
    %v170 = vpack.c.b16 %v167, %v166
    %v171 = vpack.c.b16 %v169, %v168
    %v175 = vsel %vm105, %v161, 0
    %177 = vmatprep.subr.bf16.mxu0 0
    %178 = vmatpush1.bf16.msra.mxu0 %v170
    %179 = vmatprep.subr.bf16.mxu0 0
    %180 = vmatpush1.bf16.msra.mxu0 %v171
    %181 = vmatprep.subr.bf16.mxu0 0
    %182 = vmatpush1.bf16.msra.mxu0 0
    %183 = vmatprep.subr.bf16.mxu0 0
    %184 = vmatpush1.bf16.msra.mxu0 0
    %185 = vmatprep.subr.bf16.mxu0 0
    %186 = vmatpush1.bf16.msra.mxu0 0
    %187 = vmatprep.subr.bf16.mxu0 0
    %188 = vmatpush1.bf16.msra.mxu0 0
    %189 = vmatprep.subr.bf16.mxu0 0
    %190 = vmatpush1.bf16.msra.mxu0 0
    %191 = vmatprep.subr.bf16.mxu0 0
    %192 = vmatpush1.bf16.msra.mxu0 0
    %193 = vmatprep.subr.bf16.mxu0 0
    %194 = vmatpush1.bf16.msra.mxu0 0
    %195 = vmatprep.subr.bf16.mxu0 0
    %196 = vmatpush1.bf16.msra.mxu0 0
    %197 = vmatprep.subr.bf16.mxu0 0
    %198 = vmatpush1.bf16.msra.mxu0 0
    %199 = vmatprep.subr.bf16.mxu0 0
    %200 = vmatpush1.bf16.msra.mxu0 0
    %201 = vmatprep.subr.bf16.mxu0 0
    %202 = vmatpush1.bf16.msra.mxu0 0
    %203 = vmatprep.subr.bf16.mxu0 0
    %204 = vmatpush1.bf16.msra.mxu0 0
    %205 = vmatprep.subr.bf16.mxu0 0
    %206 = vmatpush1.bf16.msra.mxu0 0
    %207 = vmatprep.subr.bf16.mxu0 0
    %208 = vmatpush1.bf16.msra.mxu0 0
    %209 = vmatprep.mubr.bf16.mxu0 0
    %210 = vmatmul.mubr.bf16.gmra.mrb[0].mxu0 %v175
    %v211 = vpop.f32.mrb[0].mxu0
    %v212 = vadd.f32 0.0, %v211
    %v213 = vpop.f32.mrb[0].mxu0
    %v214 = vpop.f32.mrb[0].mxu0
    %v215 = vadd.f32 0.0, %v214
    %v216 = vpop.f32.mrb[0].mxu0
    %217 = vdwg.mxu0
    %v218 = vpack.c.bf16 %v215, %v212
    %v219 = vld [vmem:[#allocation5] sm:$0xf]
    %v220 = vld [vmem:[#allocation5 + $0x4] sm:$0xf]
    %v221 = vld [vmem:[#allocation7] sm:$0xf]
    %v222 = vld [vmem:[#allocation7 + $0x4] sm:$0xf]
    %v223 = vld [vmem:[#allocation7 + $0x8] sm:$0xf]
    %v224 = vld [vmem:[#allocation7 + $0xc] sm:$0xf]
    %v227 = vunpack.c.l.b16 %v219
    %v228 = vunpack.c.l.b16 %v220
    %v229 = vpack.c.b16 %v228, %v227
    %v234 = vunpack.c.l.b16 %v221
    %v235 = vunpack.c.l.b16 %v222
    %v236 = vunpack.c.l.b16 %v223
    %v237 = vunpack.c.l.b16 %v224
    %v238 = vpack.c.b16 %v235, %v234
    %v239 = vpack.c.b16 %v237, %v236
    %v243 = vsel %vm105, %v229, 0
    %245 = vmatprep.subr.bf16.mxu0 0
    %246 = vmatpush1.bf16.msra.mxu0 %v238
    %247 = vmatprep.subr.bf16.mxu0 0
    %248 = vmatpush1.bf16.msra.mxu0 %v239
    %249 = vmatprep.subr.bf16.mxu0 0
    %250 = vmatpush1.bf16.msra.mxu0 0
    %251 = vmatprep.subr.bf16.mxu0 0
    %252 = vmatpush1.bf16.msra.mxu0 0
    %253 = vmatprep.subr.bf16.mxu0 0
    %254 = vmatpush1.bf16.msra.mxu0 0
    %255 = vmatprep.subr.bf16.mxu0 0
    %256 = vmatpush1.bf16.msra.mxu0 0
    %257 = vmatprep.subr.bf16.mxu0 0
    %258 = vmatpush1.bf16.msra.mxu0 0
    %259 = vmatprep.subr.bf16.mxu0 0
    %260 = vmatpush1.bf16.msra.mxu0 0
    %261 = vmatprep.subr.bf16.mxu0 0
    %262 = vmatpush1.bf16.msra.mxu0 0
    %263 = vmatprep.subr.bf16.mxu0 0
    %264 = vmatpush1.bf16.msra.mxu0 0
    %265 = vmatprep.subr.bf16.mxu0 0
    %266 = vmatpush1.bf16.msra.mxu0 0
    %267 = vmatprep.subr.bf16.mxu0 0
    %268 = vmatpush1.bf16.msra.mxu0 0
    %269 = vmatprep.subr.bf16.mxu0 0
    %270 = vmatpush1.bf16.msra.mxu0 0
    %271 = vmatprep.subr.bf16.mxu0 0
    %272 = vmatpush1.bf16.msra.mxu0 0
    %273 = vmatprep.subr.bf16.mxu0 0
    %274 = vmatpush1.bf16.msra.mxu0 0
    %275 = vmatprep.subr.bf16.mxu0 0
    %276 = vmatpush1.bf16.msra.mxu0 0
    %277 = vmatprep.mubr.bf16.mxu0 0
    %278 = vmatmul.mubr.bf16.gmra.mrb[0].mxu0 %v243
    %v279 = vpop.f32.mrb[0].mxu0
    %v280 = vadd.f32 0.0, %v279
    %v281 = vpop.f32.mrb[0].mxu0
    %v282 = vpop.f32.mrb[0].mxu0
    %v283 = vadd.f32 0.0, %v282
    %v284 = vpop.f32.mrb[0].mxu0
    %285 = vdwg.mxu0
    %v286 = vpack.c.bf16 %v283, %v280
    %v287 = vld [vmem:[%s3] sm:$0xf]
    %v288 = vunpack.c.l.bf16 %v287
    %v290 = vsel %vm105, %v150, 0
    %v293 = vsel %vm105, %v218, 0
    %295 = vmatprep.subr.bf16.mxu0 0
    %296 = vmatpush1.bf16.xpose.msra.mxu0 %v293
    %297 = vmatprep.subr.bf16.mxu0 0
    %298 = vmatpush1.bf16.xpose.msra.mxu0 0
    %299 = vmatprep.subr.bf16.mxu0 0
    %300 = vmatpush1.bf16.xpose.msra.mxu0 0
    %301 = vmatprep.subr.bf16.mxu0 0
    %302 = vmatpush1.bf16.xpose.msra.mxu0 0
    %303 = vmatprep.subr.bf16.mxu0 0
    %304 = vmatpush1.bf16.xpose.msra.mxu0 0
    %305 = vmatprep.subr.bf16.mxu0 0
    %306 = vmatpush1.bf16.xpose.msra.mxu0 0
    %307 = vmatprep.subr.bf16.mxu0 0
    %308 = vmatpush1.bf16.xpose.msra.mxu0 0
    %309 = vmatprep.subr.bf16.mxu0 0
    %310 = vmatpush1.bf16.xpose.msra.mxu0 0
    %311 = vmatprep.subr.bf16.mxu0 0
    %312 = vmatpush1.bf16.xpose.msra.mxu0 0
    %313 = vmatprep.subr.bf16.mxu0 0
    %314 = vmatpush1.bf16.xpose.msra.mxu0 0
    %315 = vmatprep.subr.bf16.mxu0 0
    %316 = vmatpush1.bf16.xpose.msra.mxu0 0
    %317 = vmatprep.subr.bf16.mxu0 0
    %318 = vmatpush1.bf16.xpose.msra.mxu0 0
    %319 = vmatprep.subr.bf16.mxu0 0
    %320 = vmatpush1.bf16.xpose.msra.mxu0 0
    %321 = vmatprep.subr.bf16.mxu0 0
    %322 = vmatpush1.bf16.xpose.msra.mxu0 0
    %323 = vmatprep.subr.bf16.mxu0 0
    %324 = vmatpush1.bf16.xpose.msra.mxu0 0
    %325 = vmatprep.subr.bf16.mxu0 0
    %326 = vmatpush1.bf16.xpose.msra.mxu0 0
    %327 = vmatprep.mubr.bf16.mxu0 0
    %328 = vmatmul.mubr.bf16.gmra.mrb[0].mxu0 %v290
    %v329 = vpop.f32.mrb[0].mxu0
    %v330 = vadd.f32 0.0, %v329
    %v331 = vpop.f32.mrb[0].mxu0
    %v332 = vpop.f32.mrb[0].mxu0
    %v333 = vpop.f32.mrb[0].mxu0
    %334 = vdwg.mxu0
    %v335 = vmax.f32 %v330, -15.0
    %v336 = vmin.f32 %v335, 15.0
    %v337 = vmul.f32 %v336, %v288
    %vm338 = vcmask 64512
    %v339 = vsel %vm338, %v337, -inf
    %340 = vmax.xlane.f32.xlu0 %v339
    %v341 = vpop.xlane.xlu0 %340
    %v342 = vsub.f32 %v337, %v341
    %v343 = vpack.c.bf16 %v342, %v342
    %v345 = vmul.bf16 %v343, 1069105081
    %v346 = vpow.bf16.pop %v345
    %v347 = vunpack.c.l.bf16 %v346
    %v348 = vmul.f32 %v347, %v288
    %v349 = vsel %vm338, %v348, 0.0
    %350 = vadd.xlane.f32.xlu0 %v349
    %v351 = vpop.xlane.xlu0 %350
    %v352 = vadd.f32 %v351, 1e-06
    %v353 = vrcp.pop %v352
    %v354 = vmul.f32 %v348, %v353
    %v355 = vpack.c.bf16 %v354, %v354
    %vm356 = vcmask 60416
    %357 = vst.msk [vmem:[#allocation9] sm:$0xf] %vm356, %v355
    %v359 = vsel %vm338, %v355, 0
    %vm361 = vcmask 1043456
    %v363 = vsel %vm361, %v286, 0
    %365 = vmatprep.subr.bf16.mxu0 0
    %366 = vmatpush1.bf16.msra.mxu0 %v363
    %367 = vmatprep.subr.bf16.mxu0 0
    %368 = vmatpush1.bf16.msra.mxu0 0
    %369 = vmatprep.subr.bf16.mxu0 0
    %370 = vmatpush1.bf16.msra.mxu0 0
    %371 = vmatprep.subr.bf16.mxu0 0
    %372 = vmatpush1.bf16.msra.mxu0 0
    %373 = vmatprep.subr.bf16.mxu0 0
    %374 = vmatpush1.bf16.msra.mxu0 0
    %375 = vmatprep.subr.bf16.mxu0 0
    %376 = vmatpush1.bf16.msra.mxu0 0
    %377 = vmatprep.subr.bf16.mxu0 0
    %378 = vmatpush1.bf16.msra.mxu0 0
    %379 = vmatprep.subr.bf16.mxu0 0
    %380 = vmatpush1.bf16.msra.mxu0 0
    %381 = vmatprep.subr.bf16.mxu0 0
    %382 = vmatpush1.bf16.msra.mxu0 0
    %383 = vmatprep.subr.bf16.mxu0 0
    %384 = vmatpush1.bf16.msra.mxu0 0
    %385 = vmatprep.subr.bf16.mxu0 0
    %386 = vmatpush1.bf16.msra.mxu0 0
    %387 = vmatprep.subr.bf16.mxu0 0
    %388 = vmatpush1.bf16.msra.mxu0 0
    %389 = vmatprep.subr.bf16.mxu0 0
    %390 = vmatpush1.bf16.msra.mxu0 0
    %391 = vmatprep.subr.bf16.mxu0 0
    %392 = vmatpush1.bf16.msra.mxu0 0
    %393 = vmatprep.subr.bf16.mxu0 0
    %394 = vmatpush1.bf16.msra.mxu0 0
    %395 = vmatprep.subr.bf16.mxu0 0
    %396 = vmatpush1.bf16.msra.mxu0 0
    %397 = vmatprep.mubr.bf16.mxu0 0
    %398 = vmatmul.mubr.bf16.gmra.mrb[0].mxu0 %v359
    %v399 = vpop.f32.mrb[0].mxu0
    %v400 = vadd.f32 0.0, %v399
    %v401 = vpop.f32.mrb[0].mxu0
    %v402 = vpop.f32.mrb[0].mxu0
    %v403 = vpop.f32.mrb[0].mxu0
    %404 = vdwg.mxu0
    %406 = vrot.lane.b32.xlu0 %v150, 96
    %v407 = vpop.permute.xlu0 %406
    %409 = vrot.lane.b32.xlu0 %v218, 96
    %v410 = vpop.permute.xlu0 %409
    %v412 = vsel %vm105, %v407, 0
    %v415 = vsel %vm105, %v410, 0
    %417 = vmatprep.subr.bf16.mxu0 0
    %418 = vmatpush1.bf16.xpose.msra.mxu0 %v415
    %419 = vmatprep.subr.bf16.mxu0 0
    %420 = vmatpush1.bf16.xpose.msra.mxu0 0
    %421 = vmatprep.subr.bf16.mxu0 0
    %422 = vmatpush1.bf16.xpose.msra.mxu0 0
    %423 = vmatprep.subr.bf16.mxu0 0
    %424 = vmatpush1.bf16.xpose.msra.mxu0 0
    %425 = vmatprep.subr.bf16.mxu0 0
    %426 = vmatpush1.bf16.xpose.msra.mxu0 0
    %427 = vmatprep.subr.bf16.mxu0 0
    %428 = vmatpush1.bf16.xpose.msra.mxu0 0
    %429 = vmatprep.subr.bf16.mxu0 0
    %430 = vmatpush1.bf16.xpose.msra.mxu0 0
    %431 = vmatprep.subr.bf16.mxu0 0
    %432 = vmatpush1.bf16.xpose.msra.mxu0 0
    %433 = vmatprep.subr.bf16.mxu0 0
    %434 = vmatpush1.bf16.xpose.msra.mxu0 0
    %435 = vmatprep.subr.bf16.mxu0 0
    %436 = vmatpush1.bf16.xpose.msra.mxu0 0
    %437 = vmatprep.subr.bf16.mxu0 0
    %438 = vmatpush1.bf16.xpose.msra.mxu0 0
    %439 = vmatprep.subr.bf16.mxu0 0
    %440 = vmatpush1.bf16.xpose.msra.mxu0 0
    %441 = vmatprep.subr.bf16.mxu0 0
    %442 = vmatpush1.bf16.xpose.msra.mxu0 0
    %443 = vmatprep.subr.bf16.mxu0 0
    %444 = vmatpush1.bf16.xpose.msra.mxu0 0
    %445 = vmatprep.subr.bf16.mxu0 0
    %446 = vmatpush1.bf16.xpose.msra.mxu0 0
    %447 = vmatprep.subr.bf16.mxu0 0
    %448 = vmatpush1.bf16.xpose.msra.mxu0 0
    %449 = vmatprep.mubr.bf16.mxu0 0
    %450 = vmatmul.mubr.bf16.gmra.mrb[0].mxu0 %v412
    %v451 = vpop.f32.mrb[0].mxu0
    %v452 = vadd.f32 0.0, %v451
    %v453 = vpop.f32.mrb[0].mxu0
    %v454 = vpop.f32.mrb[0].mxu0
    %v455 = vpop.f32.mrb[0].mxu0
    %456 = vdwg.mxu0
    %v457 = vmax.f32 %v452, -15.0
    %v458 = vmin.f32 %v457, 15.0
    %v459 = vmul.f32 %v458, %v288
    %v460 = vsel %vm338, %v459, -inf
    %461 = vmax.xlane.f32.xlu0 %v460
    %v462 = vpop.xlane.xlu0 %461
    %v463 = vsub.f32 %v459, %v462
    %v464 = vpack.c.bf16 %v463, %v463
    %v466 = vmul.bf16 %v464, 1069105081
    %v467 = vpow.bf16.pop %v466
    %v468 = vunpack.c.l.bf16 %v467
    %v469 = vmul.f32 %v468, %v288
    %v470 = vsel %vm338, %v469, 0.0
    %471 = vadd.xlane.f32.xlu0 %v470
    %v472 = vpop.xlane.xlu0 %471
    %v473 = vadd.f32 %v472, 1e-06
    %v474 = vrcp.pop %v473
    %v475 = vmul.f32 %v469, %v474
    %v476 = vpack.c.bf16 %v475, %v475
    %s477 = scalar_lea.vmem [#allocation9], 8
    %478 = vst.msk [vmem:[%s477] sm:$0xf] %vm356, %v476
    %480 = vrot.lane.b32.xlu0 %v286, 96
    %v481 = vpop.permute.xlu0 %480
    %v483 = vsel %vm338, %v476, 0
    %v486 = vsel %vm361, %v481, 0
    %488 = vmatprep.subr.bf16.mxu0 0
    %489 = vmatpush1.bf16.msra.mxu0 %v486
    %490 = vmatprep.subr.bf16.mxu0 0
    %491 = vmatpush1.bf16.msra.mxu0 0
    %492 = vmatprep.subr.bf16.mxu0 0
    %493 = vmatpush1.bf16.msra.mxu0 0
    %494 = vmatprep.subr.bf16.mxu0 0
    %495 = vmatpush1.bf16.msra.mxu0 0
    %496 = vmatprep.subr.bf16.mxu0 0
    %497 = vmatpush1.bf16.msra.mxu0 0
    %498 = vmatprep.subr.bf16.mxu0 0
    %499 = vmatpush1.bf16.msra.mxu0 0
    %500 = vmatprep.subr.bf16.mxu0 0
    %501 = vmatpush1.bf16.msra.mxu0 0
    %502 = vmatprep.subr.bf16.mxu0 0
    %503 = vmatpush1.bf16.msra.mxu0 0
    %504 = vmatprep.subr.bf16.mxu0 0
    %505 = vmatpush1.bf16.msra.mxu0 0
    %506 = vmatprep.subr.bf16.mxu0 0
    %507 = vmatpush1.bf16.msra.mxu0 0
    %508 = vmatprep.subr.bf16.mxu0 0
    %509 = vmatpush1.bf16.msra.mxu0 0
    %510 = vmatprep.subr.bf16.mxu0 0
    %511 = vmatpush1.bf16.msra.mxu0 0
    %512 = vmatprep.subr.bf16.mxu0 0
    %513 = vmatpush1.bf16.msra.mxu0 0
    %514 = vmatprep.subr.bf16.mxu0 0
    %515 = vmatpush1.bf16.msra.mxu0 0
    %516 = vmatprep.subr.bf16.mxu0 0
    %517 = vmatpush1.bf16.msra.mxu0 0
    %518 = vmatprep.subr.bf16.mxu0 0
    %519 = vmatpush1.bf16.msra.mxu0 0
    %520 = vmatprep.mubr.bf16.mxu0 0
    %521 = vmatmul.mubr.bf16.gmra.mrb[0].mxu0 %v483
    %v522 = vpop.f32.mrb[0].mxu0
    %v523 = vadd.f32 0.0, %v522
    %v524 = vpop.f32.mrb[0].mxu0
    %v525 = vpop.f32.mrb[0].mxu0
    %v526 = vpop.f32.mrb[0].mxu0
    %527 = vdwg.mxu0
    %529 = vrot.lane.b32.xlu0 %v523, 32
    %v530 = vpop.permute.xlu0 %529
    %v532 = vsel %vm105, %v400, %v530
    %s533 = scalar_lea.vmem %s3, 4
    %v534 = vld [vmem:[%s533] sm:$0xf]
    %v535 = vunpack.c.l.bf16 %v534
    %v536 = vrot.slane %v150, 4
    %v537 = vrot.slane %v218, 4
    %v539 = vsel %vm105, %v536, 0
    %v542 = vsel %vm105, %v537, 0
    %544 = vmatprep.subr.bf16.mxu0 0
    %545 = vmatpush1.bf16.xpose.msra.mxu0 %v542
    %546 = vmatprep.subr.bf16.mxu0 0
    %547 = vmatpush1.bf16.xpose.msra.mxu0 0
    %548 = vmatprep.subr.bf16.mxu0 0
    %549 = vmatpush1.bf16.xpose.msra.mxu0 0
    %550 = vmatprep.subr.bf16.mxu0 0
    %551 = vmatpush1.bf16.xpose.msra.mxu0 0
    %552 = vmatprep.subr.bf16.mxu0 0
    %553 = vmatpush1.bf16.xpose.msra.mxu0 0
    %554 = vmatprep.subr.bf16.mxu0 0
    %555 = vmatpush1.bf16.xpose.msra.mxu0 0
    %556 = vmatprep.subr.bf16.mxu0 0
    %557 = vmatpush1.bf16.xpose.msra.mxu0 0
    %558 = vmatprep.subr.bf16.mxu0 0
    %559 = vmatpush1.bf16.xpose.msra.mxu0 0
    %560 = vmatprep.subr.bf16.mxu0 0
    %561 = vmatpush1.bf16.xpose.msra.mxu0 0
    %562 = vmatprep.subr.bf16.mxu0 0
    %563 = vmatpush1.bf16.xpose.msra.mxu0 0
    %564 = vmatprep.subr.bf16.mxu0 0
    %565 = vmatpush1.bf16.xpose.msra.mxu0 0
    %566 = vmatprep.subr.bf16.mxu0 0
    %567 = vmatpush1.bf16.xpose.msra.mxu0 0
    %568 = vmatprep.subr.bf16.mxu0 0
    %569 = vmatpush1.bf16.xpose.msra.mxu0 0
    %570 = vmatprep.subr.bf16.mxu0 0
    %571 = vmatpush1.bf16.xpose.msra.mxu0 0
    %572 = vmatprep.subr.bf16.mxu0 0
    %573 = vmatpush1.bf16.xpose.msra.mxu0 0
    %574 = vmatprep.subr.bf16.mxu0 0
    %575 = vmatpush1.bf16.xpose.msra.mxu0 0
    %576 = vmatprep.mubr.bf16.mxu0 0
    %577 = vmatmul.mubr.bf16.gmra.mrb[0].mxu0 %v539
    %v578 = vpop.f32.mrb[0].mxu0
    %v579 = vadd.f32 0.0, %v578
    %v580 = vpop.f32.mrb[0].mxu0
    %v581 = vpop.f32.mrb[0].mxu0
    %v582 = vpop.f32.mrb[0].mxu0
    %583 = vdwg.mxu0
    %v584 = vmax.f32 %v579, -15.0
    %v585 = vmin.f32 %v584, 15.0
    %v586 = vmul.f32 %v585, %v535
    %v587 = vsel %vm338, %v586, -inf
    %588 = vmax.xlane.f32.xlu0 %v587
    %v589 = vpop.xlane.xlu0 %588
    %v590 = vsub.f32 %v586, %v589
    %v591 = vpack.c.bf16 %v590, %v590
    %v593 = vmul.bf16 %v591, 1069105081
    %v594 = vpow.bf16.pop %v593
    %v595 = vunpack.c.l.bf16 %v594
    %v596 = vmul.f32 %v595, %v535
    %v597 = vsel %vm338, %v596, 0.0
    %598 = vadd.xlane.f32.xlu0 %v597
    %v599 = vpop.xlane.xlu0 %598
    %v600 = vadd.f32 %v599, 1e-06
    %v601 = vrcp.pop %v600
    %v602 = vmul.f32 %v596, %v601
    %v603 = vpack.c.bf16 %v602, %v602
    %s604 = scalar_lea.vmem [#allocation9], 4
    %605 = vst.msk [vmem:[%s604] sm:$0xf] %vm356, %v603
    %v606 = vrot.slane %v286, 4
    %v608 = vsel %vm338, %v603, 0
    %v611 = vsel %vm361, %v606, 0
    %613 = vmatprep.subr.bf16.mxu0 0
    %614 = vmatpush1.bf16.msra.mxu0 %v611
    %615 = vmatprep.subr.bf16.mxu0 0
    %616 = vmatpush1.bf16.msra.mxu0 0
    %617 = vmatprep.subr.bf16.mxu0 0
    %618 = vmatpush1.bf16.msra.mxu0 0
    %619 = vmatprep.subr.bf16.mxu0 0
    %620 = vmatpush1.bf16.msra.mxu0 0
    %621 = vmatprep.subr.bf16.mxu0 0
    %622 = vmatpush1.bf16.msra.mxu0 0
    %623 = vmatprep.subr.bf16.mxu0 0
    %624 = vmatpush1.bf16.msra.mxu0 0
    %625 = vmatprep.subr.bf16.mxu0 0
    %626 = vmatpush1.bf16.msra.mxu0 0
    %627 = vmatprep.subr.bf16.mxu0 0
    %628 = vmatpush1.bf16.msra.mxu0 0
    %629 = vmatprep.subr.bf16.mxu0 0
    %630 = vmatpush1.bf16.msra.mxu0 0
    %631 = vmatprep.subr.bf16.mxu0 0
    %632 = vmatpush1.bf16.msra.mxu0 0
    %633 = vmatprep.subr.bf16.mxu0 0
    %634 = vmatpush1.bf16.msra.mxu0 0
    %635 = vmatprep.subr.bf16.mxu0 0
    %636 = vmatpush1.bf16.msra.mxu0 0
    %637 = vmatprep.subr.bf16.mxu0 0
    %638 = vmatpush1.bf16.msra.mxu0 0
    %639 = vmatprep.subr.bf16.mxu0 0
    %640 = vmatpush1.bf16.msra.mxu0 0
    %641 = vmatprep.subr.bf16.mxu0 0
    %642 = vmatpush1.bf16.msra.mxu0 0
    %643 = vmatprep.subr.bf16.mxu0 0
    %644 = vmatpush1.bf16.msra.mxu0 0
    %645 = vmatprep.mubr.bf16.mxu0 0
    %646 = vmatmul.mubr.bf16.gmra.mrb[0].mxu0 %v608
    %v647 = vpop.f32.mrb[0].mxu0
    %v648 = vadd.f32 0.0, %v647
    %v649 = vpop.f32.mrb[0].mxu0
    %v650 = vpop.f32.mrb[0].mxu0
    %v651 = vpop.f32.mrb[0].mxu0
    %652 = vdwg.mxu0
    %653 = vrot.lane.b32.xlu0 %v536, 96
    %v654 = vpop.permute.xlu0 %653
    %655 = vrot.lane.b32.xlu0 %v537, 96
    %v656 = vpop.permute.xlu0 %655
    %v658 = vsel %vm105, %v654, 0
    %v661 = vsel %vm105, %v656, 0
    %663 = vmatprep.subr.bf16.mxu0 0
    %664 = vmatpush1.bf16.xpose.msra.mxu0 %v661
    %665 = vmatprep.subr.bf16.mxu0 0
    %666 = vmatpush1.bf16.xpose.msra.mxu0 0
    %667 = vmatprep.subr.bf16.mxu0 0
    %668 = vmatpush1.bf16.xpose.msra.mxu0 0
    %669 = vmatprep.subr.bf16.mxu0 0
    %670 = vmatpush1.bf16.xpose.msra.mxu0 0
    %671 = vmatprep.subr.bf16.mxu0 0
    %672 = vmatpush1.bf16.xpose.msra.mxu0 0
    %673 = vmatprep.subr.bf16.mxu0 0
    %674 = vmatpush1.bf16.xpose.msra.mxu0 0
    %675 = vmatprep.subr.bf16.mxu0 0
    %676 = vmatpush1.bf16.xpose.msra.mxu0 0
    %677 = vmatprep.subr.bf16.mxu0 0
    %678 = vmatpush1.bf16.xpose.msra.mxu0 0
    %679 = vmatprep.subr.bf16.mxu0 0
    %680 = vmatpush1.bf16.xpose.msra.mxu0 0
    %681 = vmatprep.subr.bf16.mxu0 0
    %682 = vmatpush1.bf16.xpose.msra.mxu0 0
    %683 = vmatprep.subr.bf16.mxu0 0
    %684 = vmatpush1.bf16.xpose.msra.mxu0 0
    %685 = vmatprep.subr.bf16.mxu0 0
    %686 = vmatpush1.bf16.xpose.msra.mxu0 0
    %687 = vmatprep.subr.bf16.mxu0 0
    %688 = vmatpush1.bf16.xpose.msra.mxu0 0
    %689 = vmatprep.subr.bf16.mxu0 0
    %690 = vmatpush1.bf16.xpose.msra.mxu0 0
    %691 = vmatprep.subr.bf16.mxu0 0
    %692 = vmatpush1.bf16.xpose.msra.mxu0 0
    %693 = vmatprep.subr.bf16.mxu0 0
    %694 = vmatpush1.bf16.xpose.msra.mxu0 0
    %695 = vmatprep.mubr.bf16.mxu0 0
    %696 = vmatmul.mubr.bf16.gmra.mrb[0].mxu0 %v658
    %v697 = vpop.f32.mrb[0].mxu0
    %v698 = vadd.f32 0.0, %v697
    %v699 = vpop.f32.mrb[0].mxu0
    %v700 = vpop.f32.mrb[0].mxu0
    %v701 = vpop.f32.mrb[0].mxu0
    %702 = vdwg.mxu0
    %v703 = vmax.f32 %v698, -15.0
    %v704 = vmin.f32 %v703, 15.0
    %v705 = vmul.f32 %v704, %v535
    %v706 = vsel %vm338, %v705, -inf
    %707 = vmax.xlane.f32.xlu0 %v706
    %v708 = vpop.xlane.xlu0 %707
    %v709 = vsub.f32 %v705, %v708
    %v710 = vpack.c.bf16 %v709, %v709
    %v712 = vmul.bf16 %v710, 1069105081
    %v713 = vpow.bf16.pop %v712
    %v714 = vunpack.c.l.bf16 %v713
    %v715 = vmul.f32 %v714, %v535
    %v716 = vsel %vm338, %v715, 0.0
    %717 = vadd.xlane.f32.xlu0 %v716
    %v718 = vpop.xlane.xlu0 %717
    %v719 = vadd.f32 %v718, 1e-06
    %v720 = vrcp.pop %v719
    %v721 = vmul.f32 %v715, %v720
    %v722 = vpack.c.bf16 %v721, %v721
    %s723 = scalar_lea.vmem [#allocation9], 12
    %724 = vst.msk [vmem:[%s723] sm:$0xf] %vm356, %v722
    %725 = vrot.lane.b32.xlu0 %v606, 96
    %v726 = vpop.permute.xlu0 %725
    %v728 = vsel %vm338, %v722, 0
    %v731 = vsel %vm361, %v726, 0
    %733 = vmatprep.subr.bf16.mxu0 0
    %734 = vmatpush1.bf16.msra.mxu0 %v731
    %735 = vmatprep.subr.bf16.mxu0 0
    %736 = vmatpush1.bf16.msra.mxu0 0
    %737 = vmatprep.subr.bf16.mxu0 0
    %738 = vmatpush1.bf16.msra.mxu0 0
    %739 = vmatprep.subr.bf16.mxu0 0
    %740 = vmatpush1.bf16.msra.mxu0 0
    %741 = vmatprep.subr.bf16.mxu0 0
    %742 = vmatpush1.bf16.msra.mxu0 0
    %743 = vmatprep.subr.bf16.mxu0 0
    %744 = vmatpush1.bf16.msra.mxu0 0
    %745 = vmatprep.subr.bf16.mxu0 0
    %746 = vmatpush1.bf16.msra.mxu0 0
    %747 = vmatprep.subr.bf16.mxu0 0
    %748 = vmatpush1.bf16.msra.mxu0 0
    %749 = vmatprep.subr.bf16.mxu0 0
    %750 = vmatpush1.bf16.msra.mxu0 0
    %751 = vmatprep.subr.bf16.mxu0 0
    %752 = vmatpush1.bf16.msra.mxu0 0
    %753 = vmatprep.subr.bf16.mxu0 0
    %754 = vmatpush1.bf16.msra.mxu0 0
    %755 = vmatprep.subr.bf16.mxu0 0
    %756 = vmatpush1.bf16.msra.mxu0 0
    %757 = vmatprep.subr.bf16.mxu0 0
    %758 = vmatpush1.bf16.msra.mxu0 0
    %759 = vmatprep.subr.bf16.mxu0 0
    %760 = vmatpush1.bf16.msra.mxu0 0
    %761 = vmatprep.subr.bf16.mxu0 0
    %762 = vmatpush1.bf16.msra.mxu0 0
    %763 = vmatprep.subr.bf16.mxu0 0
    %764 = vmatpush1.bf16.msra.mxu0 0
    %765 = vmatprep.mubr.bf16.mxu0 0
    %766 = vmatmul.mubr.bf16.gmra.mrb[0].mxu0 %v728
    %v767 = vpop.f32.mrb[0].mxu0
    %v768 = vadd.f32 0.0, %v767
    %v769 = vpop.f32.mrb[0].mxu0
    %v770 = vpop.f32.mrb[0].mxu0
    %v771 = vpop.f32.mrb[0].mxu0
    %772 = vdwg.mxu0
    %774 = vrot.lane.b32.xlu0 %v768, 32
    %v775 = vpop.permute.xlu0 %774
    %v777 = vsel %vm105, %v648, %v775
    %v778 = vpack.c.bf16 %v777, %v532
    %v779 = vld [vmem:[%s7] sm:$0xf]
    %v780 = vld [vmem:[%s7 + $0x4] sm:$0xf]
    %v781 = vld [vmem:[%s7 + $0x8] sm:$0xf]
    %v782 = vld [vmem:[%s7 + $0xc] sm:$0xf]
    %v783 = vld [vmem:[%s7 + $0x10] sm:$0xf]
    %v784 = vld [vmem:[%s7 + $0x14] sm:$0xf]
    %v785 = vld [vmem:[%s7 + $0x18] sm:$0xf]
    %v786 = vld [vmem:[%s7 + $0x1c] sm:$0xf]
    %v787 = vld [vmem:[%s8] sm:$0x1]
    %v789 = vlaneseq
    %v790 = vshrl.u32 %v789, 7
    %v791 = vsub.s32 0, %v790
    %v792 = vrot.slane %v787, %v791
    %v802 = vunpack.c.l.b16 %v779
    %v803 = vunpack.c.l.b16 %v780
    %v804 = vunpack.c.l.b16 %v781
    %v805 = vunpack.c.l.b16 %v782
    %v806 = vunpack.c.l.b16 %v783
    %v807 = vunpack.c.l.b16 %v784
    %v808 = vunpack.c.l.b16 %v785
    %v809 = vunpack.c.l.b16 %v786
    %v810 = vpack.c.b16 %v803, %v802
    %v811 = vpack.c.b16 %v805, %v804
    %v812 = vpack.c.b16 %v807, %v806
    %v813 = vpack.c.b16 %v809, %v808
    %vm818 = vcmask 523264
    %v820 = vsel %vm818, %v778, 0
    %822 = vmatprep.subr.bf16.mxu0 0
    %823 = vmatpush1.bf16.msra.mxu0 %v810
    %824 = vmatprep.subr.bf16.mxu0 0
    %825 = vmatpush1.bf16.msra.mxu0 %v811
    %826 = vmatprep.subr.bf16.mxu0 0
    %827 = vmatpush1.bf16.msra.mxu0 %v812
    %828 = vmatprep.subr.bf16.mxu0 0
    %829 = vmatpush1.bf16.msra.mxu0 %v813
    %830 = vmatprep.subr.bf16.mxu0 0
    %831 = vmatpush1.bf16.msra.mxu0 0
    %832 = vmatprep.subr.bf16.mxu0 0
    %833 = vmatpush1.bf16.msra.mxu0 0
    %834 = vmatprep.subr.bf16.mxu0 0
    %835 = vmatpush1.bf16.msra.mxu0 0
    %836 = vmatprep.subr.bf16.mxu0 0
    %837 = vmatpush1.bf16.msra.mxu0 0
    %838 = vmatprep.subr.bf16.mxu0 0
    %839 = vmatpush1.bf16.msra.mxu0 0
    %840 = vmatprep.subr.bf16.mxu0 0
    %841 = vmatpush1.bf16.msra.mxu0 0
    %842 = vmatprep.subr.bf16.mxu0 0
    %843 = vmatpush1.bf16.msra.mxu0 0
    %844 = vmatprep.subr.bf16.mxu0 0
    %845 = vmatpush1.bf16.msra.mxu0 0
    %846 = vmatprep.subr.bf16.mxu0 0
    %847 = vmatpush1.bf16.msra.mxu0 0
    %848 = vmatprep.subr.bf16.mxu0 0
    %849 = vmatpush1.bf16.msra.mxu0 0
    %850 = vmatprep.subr.bf16.mxu0 0
    %851 = vmatpush1.bf16.msra.mxu0 0
    %852 = vmatprep.subr.bf16.mxu0 0
    %853 = vmatpush1.bf16.msra.mxu0 0
    %854 = vmatprep.mubr.bf16.mxu0 0
    %855 = vmatmul.mubr.bf16.gmra.mrb[0].mxu0 %v820
    %v856 = vpop.f32.mrb[0].mxu0
    %v857 = vadd.f32 %v792, %v856
    %v858 = vpop.f32.mrb[0].mxu0
    %v859 = vpop.f32.mrb[0].mxu0
    %v860 = vadd.f32 %v792, %v859
    %v861 = vpop.f32.mrb[0].mxu0
    %862 = vdwg.mxu0
    %v863 = vadd.f32 %v857, %v84
    %v864 = vadd.f32 %v860, %v85
    %v865 = vsel %vm105, %v863, 0.0
    %866 = vadd.xlane.f32.xlu0 %v865
    %v867 = vpop.xlane.xlu0 %866
    %v868 = vsel %vm105, %v864, 0.0
    %869 = vadd.xlane.f32.xlu0 %v868
    %v870 = vpop.xlane.xlu0 %869
    %v871 = vrcp.pop 32.0
    %v872 = vmul.f32 %v867, %v871
    %v873 = vmul.f32 %v870, %v871
    %v874 = vsub.f32 %v863, %v872
    %v875 = vsub.f32 %v864, %v873
    %v876 = vmul.f32 %v874, %v874
    %v877 = vmul.f32 %v875, %v875
    %v878 = vsel %vm105, %v876, 0.0
    %879 = vadd.xlane.f32.xlu0 %v878
    %v880 = vpop.xlane.xlu0 %879
    %v881 = vsel %vm105, %v877, 0.0
    %882 = vadd.xlane.f32.xlu0 %v881
    %v883 = vpop.xlane.xlu0 %882
    %v884 = vmul.f32 %v880, %v871
    %v885 = vmul.f32 %v883, %v871
    %v886 = vadd.f32 %v884, 1e-05
    %v887 = vadd.f32 %v885, 1e-05
    %v888 = vrsqrt.pop %v886
    %v889 = vrsqrt.pop %v887
    %v890 = vmul.f32 %v874, %v888
    %v891 = vmul.f32 %v875, %v889
    %v892 = vld [vmem:[%s9] sm:$0x1]
    %v894 = vlaneseq
    %v895 = vshrl.u32 %v894, 7
    %v896 = vsub.s32 0, %v895
    %v897 = vrot.slane %v892, %v896
    %v899 = vmul.f32 %v890, %v897
    %v900 = vmul.f32 %v891, %v897
    %v901 = vld [vmem:[%s10] sm:$0x1]
    %v903 = vlaneseq
    %v904 = vshrl.u32 %v903, 7
    %v905 = vsub.s32 0, %v904
    %v906 = vrot.slane %v901, %v905
    %v908 = vadd.f32 %v899, %v906
    %v909 = vadd.f32 %v900, %v906
    %910 = vst.msk [vmem:[#allocation8] sm:$0xff] %vm105, %v908
    %911 = vst.msk [vmem:[#allocation8 + $0x8] sm:$0xff] %vm105, %v909
    // Predicated region
    $region58: #{tpu_custom_call.1} parent=1 // pred_check
      _
    $region59: #{tpu_custom_call.1} parent=1 // pred_check_branch
      %913 = sbr.rel (0) target = $region61
    $region60: #{tpu_custom_call.1} parent=1 // pred_region
      %s915 = ssub.s32 256, 256
      %916 = vsyncadd [#allocation4], %s915
      %s917 = sshll.u32 [#allocation8], 4
      %s918 = int_to_ptr.vmem [resolvable:$true] %s917
      %923 = dma.vmem_to_hbm [thread:$0]  %s918, 256, %s11, [#allocation4], 128, 128, 8
    $region61: #{tpu_custom_call.1} parent=1 // pred_fallthru
      _
    // Predicated region
    $region62: #{tpu_custom_call.1} parent=1 // pred_check
      _
    $region63: #{tpu_custom_call.1} parent=1 // pred_check_branch
      %925 = sbr.rel (0) target = $region65
    $region64: #{tpu_custom_call.1} parent=1 // pred_region
      %s927 = ssub.s32 256, 256
      %928 = vsyncadd [#allocation10], %s927
      %s929 = sshll.u32 [#allocation9], 4
      %s930 = int_to_ptr.vmem [resolvable:$true] %s929
      %935 = dma.vmem_to_hbm [thread:$0]  %s930, 256, %s12, [#allocation10], 64, 64, 4
    $region65: #{tpu_custom_call.1} parent=1 // pred_fallthru
      _
    // Predicated region
    $region66: #{tpu_custom_call.1} parent=1 // pred_check
      _
    $region67: #{tpu_custom_call.1} parent=1 // pred_check_branch
      %937 = sbr.rel (0) target = $region69
    $region68: #{tpu_custom_call.1} parent=1 // pred_region
      %938 = dma.done [#allocation4], 256
    $region69: #{tpu_custom_call.1} parent=1 // pred_fallthru
      _
    // Predicated region
    $region70: #{tpu_custom_call.1} parent=1 // pred_check
      _
    $region71: #{tpu_custom_call.1} parent=1 // pred_check_branch
      %940 = sbr.rel (0) target = $region73
    $region72: #{tpu_custom_call.1} parent=1 // pred_region
      %941 = dma.done [#allocation10], 256
    $region73: #{tpu_custom_call.1} parent=1 // pred_fallthru
      _
    %942 = vsyncpa [#allocation3], 1
    %943 = vsyncpa [#allocation6], 1
    %944 = vsyncpa [#allocation4], 1
    %945 = vsyncpa [#allocation10], 1

</llo_original>
